<compile_context>
chip_gen: v6e
topology: v6e:2x2x1
jax: 0.10.0
libtpu: 0.0.40
codegen_flags: <defaults>
</compile_context>

<pallas_src>
import functools

import jax
import jax.numpy as jnp
from jax.experimental import pallas as pl
from jax.experimental.pallas import tpu as pltpu


# ----------------------------------------------------------------------------
# Fused Pallas kernel
# ----------------------------------------------------------------------------
def _gate_activations(gates, H):
    """All four LSTM gate activations with a SINGLE tanh on the full vreg.

    PyTorch gate order [i, f, g, o]; g uses tanh, the rest sigmoid.
    sigmoid(x) = 0.5 * (1 + tanh(0.5 * x)), so one tanh over the whole
    [Bp, 4H] (= [8,128]) vreg plus two cheap VPU selects covers everything.
    """
    lane = jax.lax.broadcasted_iota(jnp.int32, gates.shape, 1)
    is_g = (lane >= 2 * H) & (lane < 3 * H)
    t = jnp.tanh(jnp.where(is_g, gates, 0.5 * gates))
    act = jnp.where(is_g, t, 0.5 * (1.0 + t))
    return (act[:, 0:H], act[:, H:2 * H], act[:, 2 * H:3 * H],
            act[:, 3 * H:4 * H])


def _fused_forward_kernel(xflat_ref, xlast_ref, tgtrel_ref,
                          wenc_ref, benc_ref, whh1_ref,
                          wdecin_ref, bdecg_ref, whh2_ref,
                          wdec_ref, bdec_ref,
                          loss_ref, *, dt, n_valid):
    """Encoder LSTM + decode loop + Gaussian NLL, fully fused.

    xflat_ref  : [T_obs*Bp, 2]    observations, time-major, batch padded to Bp
    xlast_ref  : [Bp, 2]          X[:, -1, :]
    tgtrel_ref : [T_pred, Bp, 2]  target_abs - data_abs[:, -1, :]
    wenc/benc  : embedding folded into encoder LSTM input weights  [2,4H]/[1,4H]
    wdecin/bdecg: embedding folded into decoder LSTM input weights [2,4H]/[1,4H]
    whh1/whh2  : [H, 4H]  recurrent weights (pre-transposed)
    wdec/bdec  : [H, 5] / [1, 5]  decoder linear
    loss_ref   : [1, 1] output
    """
    Bp = xlast_ref.shape[0]
    H = whh1_ref.shape[0]
    T_obs = xflat_ref.shape[0] // Bp
    T_pred = tgtrel_ref.shape[0]
    f32 = jnp.float32

    # ---- encoder: input projection hoisted out of the recurrence (one matmul,
    # embedding already folded into wenc).  Held in registers: 8 vregs.
    gx = (jnp.dot(xflat_ref[...], wenc_ref[...], preferred_element_type=f32)
          + benc_ref[...])                                    # [T_obs*Bp, 4H]

    whh1 = whh1_ref[...]                                      # [H, 4H]
    h = jnp.zeros((Bp, H), f32)
    c = jnp.zeros((Bp, H), f32)
    for t in range(T_obs):                                    # small static trip
        gates = gx[t * Bp:(t + 1) * Bp, :] + jnp.dot(
            h, whh1, preferred_element_type=f32)
        i_g, f_g, g_g, o_g = _gate_activations(gates, H)
        c = f_g * c + i_g * g_g
        h = o_g * jnp.tanh(c)

    # ---- decode loop + Gaussian2DLikelihood with packed O(1) accumulators ----
    wdecin = wdecin_ref[...]                                  # [2, 4H]
    whh2 = whh2_ref[...]                                      # [H, 4H]
    bdecg = bdecg_ref[...]                                    # [1, 4H]
    wdec = wdec_ref[...]                                      # [H, 5]
    bdec = bdec_ref[...]                                      # [1, 5]
    dt2 = f32(dt * dt)

    def step(i, carry):
        h, c, last_pos, acc, loss_b = carry
        # decoder LSTM step (embedding folded into wdecin).
        gates = (jnp.dot(last_pos, wdecin, preferred_element_type=f32)
                 + jnp.dot(h, whh2, preferred_element_type=f32) + bdecg)
        i_g, f_g, g_g, o_g = _gate_activations(gates, H)
        c = f_g * c + i_g * g_g
        h = o_g * jnp.tanh(c)

        dec = jnp.dot(h, wdec, preferred_element_type=f32) + bdec   # [Bp, 5]
        pred = dec[:, 0:2] + last_pos                               # [Bp, 2]
        # convertToCov for this step: both exps in one lane-packed op.
        e = jnp.exp(dec[:, 2:4]) + 0.01                             # sx, sy
        cov = jnp.sqrt(e[:, 0:1] * e[:, 1:2]) * jnp.tanh(dec[:, 4:5])
        # packed running accumulator: [pred_x, pred_y, sx, sy, cov]
        acc = acc + jnp.concatenate([pred, e, cov], axis=1)         # [Bp, 5]

        # Gaussian2DLikelihood for step i (log(2*pi) omitted, as in reference).
        norm = tgtrel_ref[i] - acc[:, 0:2]                          # tgt - mean
        Sx = dt2 * acc[:, 2:3]
        Sy = dt2 * acc[:, 3:4]
        Cv = dt2 * acc[:, 4:5]
        nx = norm[:, 0:1]
        ny = norm[:, 1:2]
        det = Sx * Sy - Cv * Cv
        inv_det = pl.reciprocal(det, approx=True)     # EUP vrcp, off VALU path
        z = (nx * nx * Sy + ny * ny * Sx - 2.0 * Cv * nx * ny) * inv_det
        loss_b = loss_b + 0.5 * (z + jnp.log(det))
        return (h, c, pred, acc, loss_b)

    init = (h, c, xlast_ref[...],
            jnp.zeros((Bp, 5), f32), jnp.zeros((Bp, 1), f32))
    carry = jax.lax.fori_loop(0, T_pred, step, init, unroll=True)
    loss_b = carry[-1]                                              # [Bp, 1]

    # mask out the padded batch rows, reduce to a scalar
    row = jax.lax.broadcasted_iota(jnp.int32, (Bp, 1), 0)
    loss_b = jnp.where(row < n_valid, loss_b, 0.0)
    loss_ref[...] = jnp.sum(loss_b, axis=0, keepdims=True)          # [1, 1]


# ----------------------------------------------------------------------------
# Wrapper
# ----------------------------------------------------------------------------
def _vmem_spec():
    return pl.BlockSpec(memory_space=pltpu.MemorySpace.VMEM)


@functools.partial(jax.jit, static_argnames=("dt",))
def forward(params, X, y, data_abs, target_abs, dt=0.4):
    """training=False branch of lstm_encdec_MCDropout.forward -> scalar loss."""
    B, T_obs, in_size = X.shape
    T_pred = y.shape[1]                          # y only supplies the length
    f32 = jnp.float32

    # ---- offline weight folding (only valid because dropout_rate == 0.0) ----
    w_enc = params["wemb_t"] @ params["wih1_t"]                    # [2, 4H]
    b_enc = params["bemb"] @ params["wih1_t"] + params["b1"]       # [1, 4H]
    w_dec_in = params["wemb_t"] @ params["wih2_t"]                 # [2, 4H]
    b_dec_g = params["bemb"] @ params["wih2_t"] + params["b2"]     # [1, 4H]

    # ---- layout plumbing: pad batch to one sublane group, time-major views --
    Bp = max(8, -(-B // 8) * 8)
    pad = Bp - B
    Xp = jnp.pad(X, ((0, pad), (0, 0), (0, 0)))
    tgtp = jnp.pad(target_abs, ((0, pad), (0, 0), (0, 0)))
    dlastp = jnp.pad(data_abs[:, -1, :], ((0, pad), (0, 0)))

    x_tm = jnp.transpose(Xp, (1, 0, 2)).reshape(T_obs * Bp, in_size)
    x_last = Xp[:, -1, :]
    tgt_rel = jnp.transpose(tgtp, (1, 0, 2)) - dlastp[None]        # [T_pred,Bp,2]

    loss = pl.pallas_call(
        functools.partial(_fused_forward_kernel, dt=float(dt), n_valid=B),
        out_shape=jax.ShapeDtypeStruct((1, 1), f32),
        in_specs=[_vmem_spec() for _ in range(11)],
        out_specs=_vmem_spec(),
    )(x_tm, x_last, tgt_rel,
      w_enc, b_enc, params["whh1_t"],
      w_dec_in, b_dec_g, params["whh2_t"],
      params["wdec_t"], params["bdec"])
    return loss[0, 0]


# ----------------------------------------------------------------------------
# Parameters (deterministic synthetic init; PyTorch shapes, then pre-transposed,
# with LSTM biases folded: b = bih + bhh)
# ----------------------------------------------------------------------------
def init_params(key, in_size, E, H, out_size):
    keys = jax.random.split(key, 12)

    def u(k, shape):
        return jax.random.uniform(k, shape, jnp.float32, -0.1, 0.1)

    w_emb = u(keys[0], (E, in_size))
    b_emb = u(keys[1], (E,))
    wih1 = u(keys[2], (4 * H, E))
    whh1 = u(keys[3], (4 * H, H))
    bih1 = u(keys[4], (4 * H,))
    bhh1 = u(keys[5], (4 * H,))
    wih2 = u(keys[6], (4 * H, E))
    whh2 = u(keys[7], (4 * H, H))
    bih2 = u(keys[8], (4 * H,))
    bhh2 = u(keys[9], (4 * H,))
    wdec = u(keys[10], (out_size + 3, H))
    bdec = u(keys[11], (out_size + 3,))

    return {
        "wemb_t": w_emb.T, "bemb": b_emb.reshape(1, E),
        "wih1_t": wih1.T, "whh1_t": whh1.T,
        "b1": (bih1 + bhh1).reshape(1, 4 * H),
        "wih2_t": wih2.T, "whh2_t": whh2.T,
        "b2": (bih2 + bhh2).reshape(1, 4 * H),
        "wdec_t": wdec.T, "bdec": bdec.reshape(1, out_size + 3),
    }


# ----------------------------------------------------------------------------
# Plain-JAX reference (mirrors the quadratic PyTorch structure; self-check only;
# deliberately keeps the embedding un-folded and the batch un-padded)
# ----------------------------------------------------------------------------
def _forward_reference(params, X, y, data_abs, target_abs, dt=0.4):
    def lstm_step(x, h, c, wih_t, whh_t, b):
        Hh = h.shape[-1]
        gates = x @ wih_t + h @ whh_t + b
        i = jax.nn.sigmoid(gates[:, :Hh])
        f = jax.nn.sigmoid(gates[:, Hh:2 * Hh])
        g = jnp.tanh(gates[:, 2 * Hh:3 * Hh])
        o = jax.nn.sigmoid(gates[:, 3 * Hh:])
        c = f * c + i * g
        return o * jnp.tanh(c), c

    B, T_obs, _ = X.shape
    H = params["whh1_t"].shape[0]
    h = jnp.zeros((B, H), jnp.float32)
    c = jnp.zeros((B, H), jnp.float32)
    for t in range(T_obs):
        emb = X[:, t, :] @ params["wemb_t"] + params["bemb"]
        h, c = lstm_step(emb, h, c, params["wih1_t"], params["whh1_t"],
                         params["b1"])

    last_pos = X[:, -1, :]
    loss = jnp.float32(0.0)
    preds, sigs = [], []
    for i in range(y.shape[1]):
        emb = last_pos @ params["wemb_t"] + params["bemb"]
        h, c = lstm_step(emb, h, c, params["wih2_t"], params["whh2_t"],
                         params["b2"])
        dec = h @ params["wdec_t"] + params["bdec"]
        pred = dec[:, :2] + last_pos
        preds.append(pred)
        sigs.append(dec[:, 2:])
        last_pos = pred
        mean = data_abs[:, -1, :] + sum(preds)
        sig = jnp.stack(sigs, axis=1)
        sx = jnp.exp(sig[:, :, 0]) + 0.01
        sy = jnp.exp(sig[:, :, 1]) + 0.01
        cov = jnp.sqrt(sx * sy) * jnp.tanh(sig[:, :, 2])
        Sx = dt * dt * sx.sum(1)
        Sy = dt * dt * sy.sum(1)
        Cv = dt * dt * cov.sum(1)
        nx = target_abs[:, i, 0] - mean[:, 0]
        ny = target_abs[:, i, 1] - mean[:, 1]
        det = Sx * Sy - Cv * Cv
        z = nx * nx * Sy / det + ny * ny * Sx / det - 2.0 * Cv * nx * ny / det
        loss = loss + jnp.sum(0.5 * (z + jnp.log(det)))
    return loss


# ----------------------------------------------------------------------------
if __name__ == "__main__":
    in_size, E, H, out_size = 2, 16, 32, 2
    B, T_obs, T_pred = 2, 8, 3

    key = jax.random.PRNGKey(0)
    kp, kx, ky, kd, kt = jax.random.split(key, 5)
    params = init_params(kp, in_size, E, H, out_size)

    X = jax.random.normal(kx, (B, T_obs, in_size), jnp.float32)
    y = jax.random.normal(ky, (B, T_pred, in_size), jnp.float32)
    data_abs = jax.random.normal(kd, (B, T_obs, in_size), jnp.float32)
    target_abs = jax.random.normal(kt, (B, T_pred, in_size), jnp.float32)

    loss = forward(params, X, y, data_abs, target_abs, dt=0.4)
    loss = jax.block_until_ready(loss)
    assert jnp.isfinite(loss), "non-finite loss"

    # self-check of the fused kernel against a plain-JAX reference
    # (tolerance covers the approx reciprocal + single-tanh sigmoid identity)
    ref = _forward_reference(params, X, y, data_abs, target_abs, dt=0.4)
    assert jnp.allclose(loss, ref, rtol=5e-3, atol=5e-3), (loss, ref)

    print("KERNEL_OK")
</pallas_src>

<mosaic_0001>
module attributes {stable_mosaic.version = 11 : i64} {
  func.func @_fused_forward_kernel(%arg0: memref<64x2xf32, #tpu.memory_space<vmem>>, %arg1: memref<8x2xf32, #tpu.memory_space<vmem>>, %arg2: memref<3x8x2xf32, #tpu.memory_space<vmem>>, %arg3: memref<2x128xf32, #tpu.memory_space<vmem>>, %arg4: memref<1x128xf32, #tpu.memory_space<vmem>>, %arg5: memref<32x128xf32, #tpu.memory_space<vmem>>, %arg6: memref<2x128xf32, #tpu.memory_space<vmem>>, %arg7: memref<1x128xf32, #tpu.memory_space<vmem>>, %arg8: memref<32x128xf32, #tpu.memory_space<vmem>>, %arg9: memref<32x5xf32, #tpu.memory_space<vmem>>, %arg10: memref<1x5xf32, #tpu.memory_space<vmem>>, %arg11: memref<1x1xf32, #tpu.memory_space<vmem>>) attributes {dimension_semantics = [], scalar_prefetch = 0 : i64, scratch_operands = 0 : i64, tpu.core_type = #tpu.core_type<tc>} {
    %c0 = arith.constant 0 : index
    %c0_0 = arith.constant 0 : index
    %0 = vector.load %arg0[%c0, %c0_0] : memref<64x2xf32, #tpu.memory_space<vmem>>, vector<64x2xf32>
    %c0_1 = arith.constant 0 : index
    %c0_2 = arith.constant 0 : index
    %1 = vector.load %arg3[%c0_1, %c0_2] : memref<2x128xf32, #tpu.memory_space<vmem>>, vector<2x128xf32>
    %cst = arith.constant dense<0.000000e+00> : vector<64x128xf32>
    %2 = tpu.matmul %0, %1, %cst {dimension_numbers = #tpu.dot_dimension_numbers<[1], [0], [0], [1], [0, 0, 1, 1], [], []>} : vector<64x2xf32>, vector<2x128xf32>, vector<64x128xf32> -> vector<64x128xf32>
    %c0_3 = arith.constant 0 : index
    %c0_4 = arith.constant 0 : index
    %3 = vector.load %arg4[%c0_3, %c0_4] : memref<1x128xf32, #tpu.memory_space<vmem>>, vector<1x128xf32>
    %4 = vector.broadcast %3 : vector<1x128xf32> to vector<64x128xf32>
    %5 = arith.addf %2, %4 : vector<64x128xf32>
    %c0_5 = arith.constant 0 : index
    %c0_6 = arith.constant 0 : index
    %6 = vector.load %arg5[%c0_5, %c0_6] : memref<32x128xf32, #tpu.memory_space<vmem>>, vector<32x128xf32>
    %cst_7 = arith.constant 0.000000e+00 : f32
    %7 = vector.broadcast %cst_7 : f32 to vector<8x32xf32>
    %cst_8 = arith.constant 0.000000e+00 : f32
    %8 = vector.broadcast %cst_8 : f32 to vector<8x32xf32>
    %9 = vector.extract_strided_slice %5 {offsets = [0, 0], sizes = [8, 128], strides = [1, 1]} : vector<64x128xf32> to vector<8x128xf32>
    %cst_9 = arith.constant dense<0.000000e+00> : vector<8x128xf32>
    %10 = tpu.matmul %7, %6, %cst_9 {dimension_numbers = #tpu.dot_dimension_numbers<[1], [0], [0], [1], [0, 0, 1, 1], [], []>} : vector<8x32xf32>, vector<32x128xf32>, vector<8x128xf32> -> vector<8x128xf32>
    %11 = arith.addf %9, %10 : vector<8x128xf32>
    %12 = tpu.iota {dimensions = array<i32: 1>} : vector<8x128xi32>
    %c64_i32 = arith.constant 64 : i32
    %13 = vector.broadcast %c64_i32 : i32 to vector<8x128xi32>
    %14 = arith.cmpi sge, %12, %13 : vector<8x128xi32>
    %c96_i32 = arith.constant 96 : i32
    %15 = vector.broadcast %c96_i32 : i32 to vector<8x128xi32>
    %16 = arith.cmpi slt, %12, %15 : vector<8x128xi32>
    %17 = arith.andi %14, %16 : vector<8x128xi1>
    %cst_10 = arith.constant 5.000000e-01 : f32
    %18 = vector.broadcast %cst_10 : f32 to vector<8x128xf32>
    %19 = arith.mulf %18, %11 : vector<8x128xf32>
    %20 = arith.select %17, %11, %19 : vector<8x128xi1>, vector<8x128xf32>
    %21 = math.tanh %20 : vector<8x128xf32>
    %cst_11 = arith.constant 1.000000e+00 : f32
    %22 = vector.broadcast %cst_11 : f32 to vector<8x128xf32>
    %23 = arith.addf %22, %21 : vector<8x128xf32>
    %cst_12 = arith.constant 5.000000e-01 : f32
    %24 = vector.broadcast %cst_12 : f32 to vector<8x128xf32>
    %25 = arith.mulf %24, %23 : vector<8x128xf32>
    %26 = arith.select %17, %21, %25 : vector<8x128xi1>, vector<8x128xf32>
    %27 = vector.extract_strided_slice %26 {offsets = [0, 0], sizes = [8, 32], strides = [1, 1]} : vector<8x128xf32> to vector<8x32xf32>
    %28 = vector.extract_strided_slice %26 {offsets = [0, 32], sizes = [8, 32], strides = [1, 1]} : vector<8x128xf32> to vector<8x32xf32>
    %29 = vector.extract_strided_slice %26 {offsets = [0, 64], sizes = [8, 32], strides = [1, 1]} : vector<8x128xf32> to vector<8x32xf32>
    %30 = vector.extract_strided_slice %26 {offsets = [0, 96], sizes = [8, 32], strides = [1, 1]} : vector<8x128xf32> to vector<8x32xf32>
    %31 = arith.mulf %28, %8 : vector<8x32xf32>
    %32 = arith.mulf %27, %29 : vector<8x32xf32>
    %33 = arith.addf %31, %32 : vector<8x32xf32>
    %34 = math.tanh %33 : vector<8x32xf32>
    %35 = arith.mulf %30, %34 : vector<8x32xf32>
    %36 = vector.extract_strided_slice %5 {offsets = [8, 0], sizes = [8, 128], strides = [1, 1]} : vector<64x128xf32> to vector<8x128xf32>
    %cst_13 = arith.constant dense<0.000000e+00> : vector<8x128xf32>
    %37 = tpu.matmul %35, %6, %cst_13 {dimension_numbers = #tpu.dot_dimension_numbers<[1], [0], [0], [1], [0, 0, 1, 1], [], []>} : vector<8x32xf32>, vector<32x128xf32>, vector<8x128xf32> -> vector<8x128xf32>
    %38 = arith.addf %36, %37 : vector<8x128xf32>
    %39 = tpu.iota {dimensions = array<i32: 1>} : vector<8x128xi32>
    %c64_i32_14 = arith.constant 64 : i32
    %40 = vector.broadcast %c64_i32_14 : i32 to vector<8x128xi32>
    %41 = arith.cmpi sge, %39, %40 : vector<8x128xi32>
    %c96_i32_15 = arith.constant 96 : i32
    %42 = vector.broadcast %c96_i32_15 : i32 to vector<8x128xi32>
    %43 = arith.cmpi slt, %39, %42 : vector<8x128xi32>
    %44 = arith.andi %41, %43 : vector<8x128xi1>
    %cst_16 = arith.constant 5.000000e-01 : f32
    %45 = vector.broadcast %cst_16 : f32 to vector<8x128xf32>
    %46 = arith.mulf %45, %38 : vector<8x128xf32>
    %47 = arith.select %44, %38, %46 : vector<8x128xi1>, vector<8x128xf32>
    %48 = math.tanh %47 : vector<8x128xf32>
    %cst_17 = arith.constant 1.000000e+00 : f32
    %49 = vector.broadcast %cst_17 : f32 to vector<8x128xf32>
    %50 = arith.addf %49, %48 : vector<8x128xf32>
    %cst_18 = arith.constant 5.000000e-01 : f32
    %51 = vector.broadcast %cst_18 : f32 to vector<8x128xf32>
    %52 = arith.mulf %51, %50 : vector<8x128xf32>
    %53 = arith.select %44, %48, %52 : vector<8x128xi1>, vector<8x128xf32>
    %54 = vector.extract_strided_slice %53 {offsets = [0, 0], sizes = [8, 32], strides = [1, 1]} : vector<8x128xf32> to vector<8x32xf32>
    %55 = vector.extract_strided_slice %53 {offsets = [0, 32], sizes = [8, 32], strides = [1, 1]} : vector<8x128xf32> to vector<8x32xf32>
    %56 = vector.extract_strided_slice %53 {offsets = [0, 64], sizes = [8, 32], strides = [1, 1]} : vector<8x128xf32> to vector<8x32xf32>
    %57 = vector.extract_strided_slice %53 {offsets = [0, 96], sizes = [8, 32], strides = [1, 1]} : vector<8x128xf32> to vector<8x32xf32>
    %58 = arith.mulf %55, %33 : vector<8x32xf32>
    %59 = arith.mulf %54, %56 : vector<8x32xf32>
    %60 = arith.addf %58, %59 : vector<8x32xf32>
    %61 = math.tanh %60 : vector<8x32xf32>
    %62 = arith.mulf %57, %61 : vector<8x32xf32>
    %63 = vector.extract_strided_slice %5 {offsets = [16, 0], sizes = [8, 128], strides = [1, 1]} : vector<64x128xf32> to vector<8x128xf32>
    %cst_19 = arith.constant dense<0.000000e+00> : vector<8x128xf32>
    %64 = tpu.matmul %62, %6, %cst_19 {dimension_numbers = #tpu.dot_dimension_numbers<[1], [0], [0], [1], [0, 0, 1, 1], [], []>} : vector<8x32xf32>, vector<32x128xf32>, vector<8x128xf32> -> vector<8x128xf32>
    %65 = arith.addf %63, %64 : vector<8x128xf32>
    %66 = tpu.iota {dimensions = array<i32: 1>} : vector<8x128xi32>
    %c64_i32_20 = arith.constant 64 : i32
    %67 = vector.broadcast %c64_i32_20 : i32 to vector<8x128xi32>
    %68 = arith.cmpi sge, %66, %67 : vector<8x128xi32>
    %c96_i32_21 = arith.constant 96 : i32
    %69 = vector.broadcast %c96_i32_21 : i32 to vector<8x128xi32>
    %70 = arith.cmpi slt, %66, %69 : vector<8x128xi32>
    %71 = arith.andi %68, %70 : vector<8x128xi1>
    %cst_22 = arith.constant 5.000000e-01 : f32
    %72 = vector.broadcast %cst_22 : f32 to vector<8x128xf32>
    %73 = arith.mulf %72, %65 : vector<8x128xf32>
    %74 = arith.select %71, %65, %73 : vector<8x128xi1>, vector<8x128xf32>
    %75 = math.tanh %74 : vector<8x128xf32>
    %cst_23 = arith.constant 1.000000e+00 : f32
    %76 = vector.broadcast %cst_23 : f32 to vector<8x128xf32>
    %77 = arith.addf %76, %75 : vector<8x128xf32>
    %cst_24 = arith.constant 5.000000e-01 : f32
    %78 = vector.broadcast %cst_24 : f32 to vector<8x128xf32>
    %79 = arith.mulf %78, %77 : vector<8x128xf32>
    %80 = arith.select %71, %75, %79 : vector<8x128xi1>, vector<8x128xf32>
    %81 = vector.extract_strided_slice %80 {offsets = [0, 0], sizes = [8, 32], strides = [1, 1]} : vector<8x128xf32> to vector<8x32xf32>
    %82 = vector.extract_strided_slice %80 {offsets = [0, 32], sizes = [8, 32], strides = [1, 1]} : vector<8x128xf32> to vector<8x32xf32>
    %83 = vector.extract_strided_slice %80 {offsets = [0, 64], sizes = [8, 32], strides = [1, 1]} : vector<8x128xf32> to vector<8x32xf32>
    %84 = vector.extract_strided_slice %80 {offsets = [0, 96], sizes = [8, 32], strides = [1, 1]} : vector<8x128xf32> to vector<8x32xf32>
    %85 = arith.mulf %82, %60 : vector<8x32xf32>
    %86 = arith.mulf %81, %83 : vector<8x32xf32>
    %87 = arith.addf %85, %86 : vector<8x32xf32>
    %88 = math.tanh %87 : vector<8x32xf32>
    %89 = arith.mulf %84, %88 : vector<8x32xf32>
    %90 = vector.extract_strided_slice %5 {offsets = [24, 0], sizes = [8, 128], strides = [1, 1]} : vector<64x128xf32> to vector<8x128xf32>
    %cst_25 = arith.constant dense<0.000000e+00> : vector<8x128xf32>
    %91 = tpu.matmul %89, %6, %cst_25 {dimension_numbers = #tpu.dot_dimension_numbers<[1], [0], [0], [1], [0, 0, 1, 1], [], []>} : vector<8x32xf32>, vector<32x128xf32>, vector<8x128xf32> -> vector<8x128xf32>
    %92 = arith.addf %90, %91 : vector<8x128xf32>
    %93 = tpu.iota {dimensions = array<i32: 1>} : vector<8x128xi32>
    %c64_i32_26 = arith.constant 64 : i32
    %94 = vector.broadcast %c64_i32_26 : i32 to vector<8x128xi32>
    %95 = arith.cmpi sge, %93, %94 : vector<8x128xi32>
    %c96_i32_27 = arith.constant 96 : i32
    %96 = vector.broadcast %c96_i32_27 : i32 to vector<8x128xi32>
    %97 = arith.cmpi slt, %93, %96 : vector<8x128xi32>
    %98 = arith.andi %95, %97 : vector<8x128xi1>
    %cst_28 = arith.constant 5.000000e-01 : f32
    %99 = vector.broadcast %cst_28 : f32 to vector<8x128xf32>
    %100 = arith.mulf %99, %92 : vector<8x128xf32>
    %101 = arith.select %98, %92, %100 : vector<8x128xi1>, vector<8x128xf32>
    %102 = math.tanh %101 : vector<8x128xf32>
    %cst_29 = arith.constant 1.000000e+00 : f32
    %103 = vector.broadcast %cst_29 : f32 to vector<8x128xf32>
    %104 = arith.addf %103, %102 : vector<8x128xf32>
    %cst_30 = arith.constant 5.000000e-01 : f32
    %105 = vector.broadcast %cst_30 : f32 to vector<8x128xf32>
    %106 = arith.mulf %105, %104 : vector<8x128xf32>
    %107 = arith.select %98, %102, %106 : vector<8x128xi1>, vector<8x128xf32>
    %108 = vector.extract_strided_slice %107 {offsets = [0, 0], sizes = [8, 32], strides = [1, 1]} : vector<8x128xf32> to vector<8x32xf32>
    %109 = vector.extract_strided_slice %107 {offsets = [0, 32], sizes = [8, 32], strides = [1, 1]} : vector<8x128xf32> to vector<8x32xf32>
    %110 = vector.extract_strided_slice %107 {offsets = [0, 64], sizes = [8, 32], strides = [1, 1]} : vector<8x128xf32> to vector<8x32xf32>
    %111 = vector.extract_strided_slice %107 {offsets = [0, 96], sizes = [8, 32], strides = [1, 1]} : vector<8x128xf32> to vector<8x32xf32>
    %112 = arith.mulf %109, %87 : vector<8x32xf32>
    %113 = arith.mulf %108, %110 : vector<8x32xf32>
    %114 = arith.addf %112, %113 : vector<8x32xf32>
    %115 = math.tanh %114 : vector<8x32xf32>
    %116 = arith.mulf %111, %115 : vector<8x32xf32>
    %117 = vector.extract_strided_slice %5 {offsets = [32, 0], sizes = [8, 128], strides = [1, 1]} : vector<64x128xf32> to vector<8x128xf32>
    %cst_31 = arith.constant dense<0.000000e+00> : vector<8x128xf32>
    %118 = tpu.matmul %116, %6, %cst_31 {dimension_numbers = #tpu.dot_dimension_numbers<[1], [0], [0], [1], [0, 0, 1, 1], [], []>} : vector<8x32xf32>, vector<32x128xf32>, vector<8x128xf32> -> vector<8x128xf32>
    %119 = arith.addf %117, %118 : vector<8x128xf32>
    %120 = tpu.iota {dimensions = array<i32: 1>} : vector<8x128xi32>
    %c64_i32_32 = arith.constant 64 : i32
    %121 = vector.broadcast %c64_i32_32 : i32 to vector<8x128xi32>
    %122 = arith.cmpi sge, %120, %121 : vector<8x128xi32>
    %c96_i32_33 = arith.constant 96 : i32
    %123 = vector.broadcast %c96_i32_33 : i32 to vector<8x128xi32>
    %124 = arith.cmpi slt, %120, %123 : vector<8x128xi32>
    %125 = arith.andi %122, %124 : vector<8x128xi1>
    %cst_34 = arith.constant 5.000000e-01 : f32
    %126 = vector.broadcast %cst_34 : f32 to vector<8x128xf32>
    %127 = arith.mulf %126, %119 : vector<8x128xf32>
    %128 = arith.select %125, %119, %127 : vector<8x128xi1>, vector<8x128xf32>
    %129 = math.tanh %128 : vector<8x128xf32>
    %cst_35 = arith.constant 1.000000e+00 : f32
    %130 = vector.broadcast %cst_35 : f32 to vector<8x128xf32>
    %131 = arith.addf %130, %129 : vector<8x128xf32>
    %cst_36 = arith.constant 5.000000e-01 : f32
    %132 = vector.broadcast %cst_36 : f32 to vector<8x128xf32>
    %133 = arith.mulf %132, %131 : vector<8x128xf32>
    %134 = arith.select %125, %129, %133 : vector<8x128xi1>, vector<8x128xf32>
    %135 = vector.extract_strided_slice %134 {offsets = [0, 0], sizes = [8, 32], strides = [1, 1]} : vector<8x128xf32> to vector<8x32xf32>
    %136 = vector.extract_strided_slice %134 {offsets = [0, 32], sizes = [8, 32], strides = [1, 1]} : vector<8x128xf32> to vector<8x32xf32>
    %137 = vector.extract_strided_slice %134 {offsets = [0, 64], sizes = [8, 32], strides = [1, 1]} : vector<8x128xf32> to vector<8x32xf32>
    %138 = vector.extract_strided_slice %134 {offsets = [0, 96], sizes = [8, 32], strides = [1, 1]} : vector<8x128xf32> to vector<8x32xf32>
    %139 = arith.mulf %136, %114 : vector<8x32xf32>
    %140 = arith.mulf %135, %137 : vector<8x32xf32>
    %141 = arith.addf %139, %140 : vector<8x32xf32>
    %142 = math.tanh %141 : vector<8x32xf32>
    %143 = arith.mulf %138, %142 : vector<8x32xf32>
    %144 = vector.extract_strided_slice %5 {offsets = [40, 0], sizes = [8, 128], strides = [1, 1]} : vector<64x128xf32> to vector<8x128xf32>
    %cst_37 = arith.constant dense<0.000000e+00> : vector<8x128xf32>
    %145 = tpu.matmul %143, %6, %cst_37 {dimension_numbers = #tpu.dot_dimension_numbers<[1], [0], [0], [1], [0, 0, 1, 1], [], []>} : vector<8x32xf32>, vector<32x128xf32>, vector<8x128xf32> -> vector<8x128xf32>
    %146 = arith.addf %144, %145 : vector<8x128xf32>
    %147 = tpu.iota {dimensions = array<i32: 1>} : vector<8x128xi32>
    %c64_i32_38 = arith.constant 64 : i32
    %148 = vector.broadcast %c64_i32_38 : i32 to vector<8x128xi32>
    %149 = arith.cmpi sge, %147, %148 : vector<8x128xi32>
    %c96_i32_39 = arith.constant 96 : i32
    %150 = vector.broadcast %c96_i32_39 : i32 to vector<8x128xi32>
    %151 = arith.cmpi slt, %147, %150 : vector<8x128xi32>
    %152 = arith.andi %149, %151 : vector<8x128xi1>
    %cst_40 = arith.constant 5.000000e-01 : f32
    %153 = vector.broadcast %cst_40 : f32 to vector<8x128xf32>
    %154 = arith.mulf %153, %146 : vector<8x128xf32>
    %155 = arith.select %152, %146, %154 : vector<8x128xi1>, vector<8x128xf32>
    %156 = math.tanh %155 : vector<8x128xf32>
    %cst_41 = arith.constant 1.000000e+00 : f32
    %157 = vector.broadcast %cst_41 : f32 to vector<8x128xf32>
    %158 = arith.addf %157, %156 : vector<8x128xf32>
    %cst_42 = arith.constant 5.000000e-01 : f32
    %159 = vector.broadcast %cst_42 : f32 to vector<8x128xf32>
    %160 = arith.mulf %159, %158 : vector<8x128xf32>
    %161 = arith.select %152, %156, %160 : vector<8x128xi1>, vector<8x128xf32>
    %162 = vector.extract_strided_slice %161 {offsets = [0, 0], sizes = [8, 32], strides = [1, 1]} : vector<8x128xf32> to vector<8x32xf32>
    %163 = vector.extract_strided_slice %161 {offsets = [0, 32], sizes = [8, 32], strides = [1, 1]} : vector<8x128xf32> to vector<8x32xf32>
    %164 = vector.extract_strided_slice %161 {offsets = [0, 64], sizes = [8, 32], strides = [1, 1]} : vector<8x128xf32> to vector<8x32xf32>
    %165 = vector.extract_strided_slice %161 {offsets = [0, 96], sizes = [8, 32], strides = [1, 1]} : vector<8x128xf32> to vector<8x32xf32>
    %166 = arith.mulf %163, %141 : vector<8x32xf32>
    %167 = arith.mulf %162, %164 : vector<8x32xf32>
    %168 = arith.addf %166, %167 : vector<8x32xf32>
    %169 = math.tanh %168 : vector<8x32xf32>
    %170 = arith.mulf %165, %169 : vector<8x32xf32>
    %171 = vector.extract_strided_slice %5 {offsets = [48, 0], sizes = [8, 128], strides = [1, 1]} : vector<64x128xf32> to vector<8x128xf32>
    %cst_43 = arith.constant dense<0.000000e+00> : vector<8x128xf32>
    %172 = tpu.matmul %170, %6, %cst_43 {dimension_numbers = #tpu.dot_dimension_numbers<[1], [0], [0], [1], [0, 0, 1, 1], [], []>} : vector<8x32xf32>, vector<32x128xf32>, vector<8x128xf32> -> vector<8x128xf32>
    %173 = arith.addf %171, %172 : vector<8x128xf32>
    %174 = tpu.iota {dimensions = array<i32: 1>} : vector<8x128xi32>
    %c64_i32_44 = arith.constant 64 : i32
    %175 = vector.broadcast %c64_i32_44 : i32 to vector<8x128xi32>
    %176 = arith.cmpi sge, %174, %175 : vector<8x128xi32>
    %c96_i32_45 = arith.constant 96 : i32
    %177 = vector.broadcast %c96_i32_45 : i32 to vector<8x128xi32>
    %178 = arith.cmpi slt, %174, %177 : vector<8x128xi32>
    %179 = arith.andi %176, %178 : vector<8x128xi1>
    %cst_46 = arith.constant 5.000000e-01 : f32
    %180 = vector.broadcast %cst_46 : f32 to vector<8x128xf32>
    %181 = arith.mulf %180, %173 : vector<8x128xf32>
    %182 = arith.select %179, %173, %181 : vector<8x128xi1>, vector<8x128xf32>
    %183 = math.tanh %182 : vector<8x128xf32>
    %cst_47 = arith.constant 1.000000e+00 : f32
    %184 = vector.broadcast %cst_47 : f32 to vector<8x128xf32>
    %185 = arith.addf %184, %183 : vector<8x128xf32>
    %cst_48 = arith.constant 5.000000e-01 : f32
    %186 = vector.broadcast %cst_48 : f32 to vector<8x128xf32>
    %187 = arith.mulf %186, %185 : vector<8x128xf32>
    %188 = arith.select %179, %183, %187 : vector<8x128xi1>, vector<8x128xf32>
    %189 = vector.extract_strided_slice %188 {offsets = [0, 0], sizes = [8, 32], strides = [1, 1]} : vector<8x128xf32> to vector<8x32xf32>
    %190 = vector.extract_strided_slice %188 {offsets = [0, 32], sizes = [8, 32], strides = [1, 1]} : vector<8x128xf32> to vector<8x32xf32>
    %191 = vector.extract_strided_slice %188 {offsets = [0, 64], sizes = [8, 32], strides = [1, 1]} : vector<8x128xf32> to vector<8x32xf32>
    %192 = vector.extract_strided_slice %188 {offsets = [0, 96], sizes = [8, 32], strides = [1, 1]} : vector<8x128xf32> to vector<8x32xf32>
    %193 = arith.mulf %190, %168 : vector<8x32xf32>
    %194 = arith.mulf %189, %191 : vector<8x32xf32>
    %195 = arith.addf %193, %194 : vector<8x32xf32>
    %196 = math.tanh %195 : vector<8x32xf32>
    %197 = arith.mulf %192, %196 : vector<8x32xf32>
    %198 = vector.extract_strided_slice %5 {offsets = [56, 0], sizes = [8, 128], strides = [1, 1]} : vector<64x128xf32> to vector<8x128xf32>
    %cst_49 = arith.constant dense<0.000000e+00> : vector<8x128xf32>
    %199 = tpu.matmul %197, %6, %cst_49 {dimension_numbers = #tpu.dot_dimension_numbers<[1], [0], [0], [1], [0, 0, 1, 1], [], []>} : vector<8x32xf32>, vector<32x128xf32>, vector<8x128xf32> -> vector<8x128xf32>
    %200 = arith.addf %198, %199 : vector<8x128xf32>
    %201 = tpu.iota {dimensions = array<i32: 1>} : vector<8x128xi32>
    %c64_i32_50 = arith.constant 64 : i32
    %202 = vector.broadcast %c64_i32_50 : i32 to vector<8x128xi32>
    %203 = arith.cmpi sge, %201, %202 : vector<8x128xi32>
    %c96_i32_51 = arith.constant 96 : i32
    %204 = vector.broadcast %c96_i32_51 : i32 to vector<8x128xi32>
    %205 = arith.cmpi slt, %201, %204 : vector<8x128xi32>
    %206 = arith.andi %203, %205 : vector<8x128xi1>
    %cst_52 = arith.constant 5.000000e-01 : f32
    %207 = vector.broadcast %cst_52 : f32 to vector<8x128xf32>
    %208 = arith.mulf %207, %200 : vector<8x128xf32>
    %209 = arith.select %206, %200, %208 : vector<8x128xi1>, vector<8x128xf32>
    %210 = math.tanh %209 : vector<8x128xf32>
    %cst_53 = arith.constant 1.000000e+00 : f32
    %211 = vector.broadcast %cst_53 : f32 to vector<8x128xf32>
    %212 = arith.addf %211, %210 : vector<8x128xf32>
    %cst_54 = arith.constant 5.000000e-01 : f32
    %213 = vector.broadcast %cst_54 : f32 to vector<8x128xf32>
    %214 = arith.mulf %213, %212 : vector<8x128xf32>
    %215 = arith.select %206, %210, %214 : vector<8x128xi1>, vector<8x128xf32>
    %216 = vector.extract_strided_slice %215 {offsets = [0, 0], sizes = [8, 32], strides = [1, 1]} : vector<8x128xf32> to vector<8x32xf32>
    %217 = vector.extract_strided_slice %215 {offsets = [0, 32], sizes = [8, 32], strides = [1, 1]} : vector<8x128xf32> to vector<8x32xf32>
    %218 = vector.extract_strided_slice %215 {offsets = [0, 64], sizes = [8, 32], strides = [1, 1]} : vector<8x128xf32> to vector<8x32xf32>
    %219 = vector.extract_strided_slice %215 {offsets = [0, 96], sizes = [8, 32], strides = [1, 1]} : vector<8x128xf32> to vector<8x32xf32>
    %220 = arith.mulf %217, %195 : vector<8x32xf32>
    %221 = arith.mulf %216, %218 : vector<8x32xf32>
    %222 = arith.addf %220, %221 : vector<8x32xf32>
    %223 = math.tanh %222 : vector<8x32xf32>
    %224 = arith.mulf %219, %223 : vector<8x32xf32>
    %c0_55 = arith.constant 0 : index
    %c0_56 = arith.constant 0 : index
    %225 = vector.load %arg6[%c0_55, %c0_56] : memref<2x128xf32, #tpu.memory_space<vmem>>, vector<2x128xf32>
    %c0_57 = arith.constant 0 : index
    %c0_58 = arith.constant 0 : index
    %226 = vector.load %arg8[%c0_57, %c0_58] : memref<32x128xf32, #tpu.memory_space<vmem>>, vector<32x128xf32>
    %c0_59 = arith.constant 0 : index
    %c0_60 = arith.constant 0 : index
    %227 = vector.load %arg7[%c0_59, %c0_60] : memref<1x128xf32, #tpu.memory_space<vmem>>, vector<1x128xf32>
    %c0_61 = arith.constant 0 : index
    %c0_62 = arith.constant 0 : index
    %228 = vector.load %arg9[%c0_61, %c0_62] : memref<32x5xf32, #tpu.memory_space<vmem>>, vector<32x5xf32>
    %c0_63 = arith.constant 0 : index
    %c0_64 = arith.constant 0 : index
    %229 = vector.load %arg10[%c0_63, %c0_64] : memref<1x5xf32, #tpu.memory_space<vmem>>, vector<1x5xf32>
    %c0_65 = arith.constant 0 : index
    %c0_66 = arith.constant 0 : index
    %230 = vector.load %arg1[%c0_65, %c0_66] : memref<8x2xf32, #tpu.memory_space<vmem>>, vector<8x2xf32>
    %cst_67 = arith.constant 0.000000e+00 : f32
    %231 = vector.broadcast %cst_67 : f32 to vector<8x5xf32>
    %cst_68 = arith.constant 0.000000e+00 : f32
    %232 = vector.broadcast %cst_68 : f32 to vector<8x1xf32>
    %cst_69 = arith.constant 1.600000e-01 : f32
    %c0_i32 = arith.constant 0 : i32
    %cst_70 = arith.constant dense<0.000000e+00> : vector<8x128xf32>
    %233 = tpu.matmul %230, %225, %cst_70 {dimension_numbers = #tpu.dot_dimension_numbers<[1], [0], [0], [1], [0, 0, 1, 1], [], []>} : vector<8x2xf32>, vector<2x128xf32>, vector<8x128xf32> -> vector<8x128xf32>
    %cst_71 = arith.constant dense<0.000000e+00> : vector<8x128xf32>
    %234 = tpu.matmul %224, %226, %cst_71 {dimension_numbers = #tpu.dot_dimension_numbers<[1], [0], [0], [1], [0, 0, 1, 1], [], []>} : vector<8x32xf32>, vector<32x128xf32>, vector<8x128xf32> -> vector<8x128xf32>
    %235 = arith.addf %233, %234 : vector<8x128xf32>
    %236 = vector.broadcast %227 : vector<1x128xf32> to vector<8x128xf32>
    %237 = arith.addf %235, %236 : vector<8x128xf32>
    %238 = tpu.iota {dimensions = array<i32: 1>} : vector<8x128xi32>
    %c64_i32_72 = arith.constant 64 : i32
    %239 = vector.broadcast %c64_i32_72 : i32 to vector<8x128xi32>
    %240 = arith.cmpi sge, %238, %239 : vector<8x128xi32>
    %c96_i32_73 = arith.constant 96 : i32
    %241 = vector.broadcast %c96_i32_73 : i32 to vector<8x128xi32>
    %242 = arith.cmpi slt, %238, %241 : vector<8x128xi32>
    %243 = arith.andi %240, %242 : vector<8x128xi1>
    %cst_74 = arith.constant 5.000000e-01 : f32
    %244 = vector.broadcast %cst_74 : f32 to vector<8x128xf32>
    %245 = arith.mulf %244, %237 : vector<8x128xf32>
    %246 = arith.select %243, %237, %245 : vector<8x128xi1>, vector<8x128xf32>
    %247 = math.tanh %246 : vector<8x128xf32>
    %cst_75 = arith.constant 1.000000e+00 : f32
    %248 = vector.broadcast %cst_75 : f32 to vector<8x128xf32>
    %249 = arith.addf %248, %247 : vector<8x128xf32>
    %cst_76 = arith.constant 5.000000e-01 : f32
    %250 = vector.broadcast %cst_76 : f32 to vector<8x128xf32>
    %251 = arith.mulf %250, %249 : vector<8x128xf32>
    %252 = arith.select %243, %247, %251 : vector<8x128xi1>, vector<8x128xf32>
    %253 = vector.extract_strided_slice %252 {offsets = [0, 0], sizes = [8, 32], strides = [1, 1]} : vector<8x128xf32> to vector<8x32xf32>
    %254 = vector.extract_strided_slice %252 {offsets = [0, 32], sizes = [8, 32], strides = [1, 1]} : vector<8x128xf32> to vector<8x32xf32>
    %255 = vector.extract_strided_slice %252 {offsets = [0, 64], sizes = [8, 32], strides = [1, 1]} : vector<8x128xf32> to vector<8x32xf32>
    %256 = vector.extract_strided_slice %252 {offsets = [0, 96], sizes = [8, 32], strides = [1, 1]} : vector<8x128xf32> to vector<8x32xf32>
    %257 = arith.mulf %254, %222 : vector<8x32xf32>
    %258 = arith.mulf %253, %255 : vector<8x32xf32>
    %259 = arith.addf %257, %258 : vector<8x32xf32>
    %260 = math.tanh %259 : vector<8x32xf32>
    %261 = arith.mulf %256, %260 : vector<8x32xf32>
    %cst_77 = arith.constant dense<0.000000e+00> : vector<8x5xf32>
    %262 = tpu.matmul %261, %228, %cst_77 {dimension_numbers = #tpu.dot_dimension_numbers<[1], [0], [0], [1], [0, 0, 1, 1], [], []>} : vector<8x32xf32>, vector<32x5xf32>, vector<8x5xf32> -> vector<8x5xf32>
    %263 = vector.broadcast %229 : vector<1x5xf32> to vector<8x5xf32>
    %264 = arith.addf %262, %263 : vector<8x5xf32>
    %265 = vector.extract_strided_slice %264 {offsets = [0, 0], sizes = [8, 2], strides = [1, 1]} : vector<8x5xf32> to vector<8x2xf32>
    %266 = arith.addf %265, %230 : vector<8x2xf32>
    %267 = vector.extract_strided_slice %264 {offsets = [0, 2], sizes = [8, 2], strides = [1, 1]} : vector<8x5xf32> to vector<8x2xf32>
    %268 = math.exp %267 : vector<8x2xf32>
    %cst_78 = arith.constant 0.00999999977 : f32
    %269 = vector.broadcast %cst_78 : f32 to vector<8x2xf32>
    %270 = arith.addf %268, %269 : vector<8x2xf32>
    %271 = vector.extract_strided_slice %270 {offsets = [0, 0], sizes = [8, 1], strides = [1, 1]} : vector<8x2xf32> to vector<8x1xf32>
    %272 = vector.extract_strided_slice %270 {offsets = [0, 1], sizes = [8, 1], strides = [1, 1]} : vector<8x2xf32> to vector<8x1xf32>
    %273 = arith.mulf %271, %272 : vector<8x1xf32>
    %274 = math.sqrt %273 : vector<8x1xf32>
    %275 = vector.extract_strided_slice %264 {offsets = [0, 4], sizes = [8, 1], strides = [1, 1]} : vector<8x5xf32> to vector<8x1xf32>
    %276 = math.tanh %275 : vector<8x1xf32>
    %277 = arith.mulf %274, %276 : vector<8x1xf32>
    %278 = tpu.concatenate %266, %270, %277 in 1 : vector<8x2xf32>, vector<8x2xf32>, vector<8x1xf32> -> vector<8x5xf32>
    %279 = arith.addf %231, %278 : vector<8x5xf32>
    %280 = arith.index_cast %c0_i32 : i32 to index
    %c0_79 = arith.constant 0 : index
    %c0_80 = arith.constant 0 : index
    %281 = vector.load %arg2[%280, %c0_79, %c0_80] : memref<3x8x2xf32, #tpu.memory_space<vmem>>, vector<1x8x2xf32>
    %282 = vector.shape_cast %281 : vector<1x8x2xf32> to vector<8x2xf32>
    %283 = vector.extract_strided_slice %279 {offsets = [0, 0], sizes = [8, 2], strides = [1, 1]} : vector<8x5xf32> to vector<8x2xf32>
    %284 = arith.subf %282, %283 : vector<8x2xf32>
    %285 = vector.extract_strided_slice %279 {offsets = [0, 2], sizes = [8, 1], strides = [1, 1]} : vector<8x5xf32> to vector<8x1xf32>
    %286 = vector.broadcast %cst_69 : f32 to vector<8x1xf32>
    %287 = arith.mulf %286, %285 : vector<8x1xf32>
    %288 = vector.extract_strided_slice %279 {offsets = [0, 3], sizes = [8, 1], strides = [1, 1]} : vector<8x5xf32> to vector<8x1xf32>
    %289 = vector.broadcast %cst_69 : f32 to vector<8x1xf32>
    %290 = arith.mulf %289, %288 : vector<8x1xf32>
    %291 = vector.extract_strided_slice %279 {offsets = [0, 4], sizes = [8, 1], strides = [1, 1]} : vector<8x5xf32> to vector<8x1xf32>
    %292 = vector.broadcast %cst_69 : f32 to vector<8x1xf32>
    %293 = arith.mulf %292, %291 : vector<8x1xf32>
    %294 = vector.extract_strided_slice %284 {offsets = [0, 0], sizes = [8, 1], strides = [1, 1]} : vector<8x2xf32> to vector<8x1xf32>
    %295 = vector.extract_strided_slice %284 {offsets = [0, 1], sizes = [8, 1], strides = [1, 1]} : vector<8x2xf32> to vector<8x1xf32>
    %296 = arith.mulf %287, %290 : vector<8x1xf32>
    %297 = arith.mulf %293, %293 : vector<8x1xf32>
    %298 = arith.subf %296, %297 : vector<8x1xf32>
    %299 = tpu.reciprocal %298 {approx = true} : vector<8x1xf32> -> vector<8x1xf32>
    %300 = arith.mulf %294, %294 : vector<8x1xf32>
    %301 = arith.mulf %300, %290 : vector<8x1xf32>
    %302 = arith.mulf %295, %295 : vector<8x1xf32>
    %303 = arith.mulf %302, %287 : vector<8x1xf32>
    %304 = arith.addf %301, %303 : vector<8x1xf32>
    %cst_81 = arith.constant 2.000000e+00 : f32
    %305 = vector.broadcast %cst_81 : f32 to vector<8x1xf32>
    %306 = arith.mulf %305, %293 : vector<8x1xf32>
    %307 = arith.mulf %306, %294 : vector<8x1xf32>
    %308 = arith.mulf %307, %295 : vector<8x1xf32>
    %309 = arith.subf %304, %308 : vector<8x1xf32>
    %310 = arith.mulf %309, %299 : vector<8x1xf32>
    %311 = math.log %298 : vector<8x1xf32>
    %312 = arith.addf %310, %311 : vector<8x1xf32>
    %cst_82 = arith.constant 5.000000e-01 : f32
    %313 = vector.broadcast %cst_82 : f32 to vector<8x1xf32>
    %314 = arith.mulf %313, %312 : vector<8x1xf32>
    %315 = arith.addf %232, %314 : vector<8x1xf32>
    %c1_i32 = arith.constant 1 : i32
    %cst_83 = arith.constant dense<0.000000e+00> : vector<8x128xf32>
    %316 = tpu.matmul %266, %225, %cst_83 {dimension_numbers = #tpu.dot_dimension_numbers<[1], [0], [0], [1], [0, 0, 1, 1], [], []>} : vector<8x2xf32>, vector<2x128xf32>, vector<8x128xf32> -> vector<8x128xf32>
    %cst_84 = arith.constant dense<0.000000e+00> : vector<8x128xf32>
    %317 = tpu.matmul %261, %226, %cst_84 {dimension_numbers = #tpu.dot_dimension_numbers<[1], [0], [0], [1], [0, 0, 1, 1], [], []>} : vector<8x32xf32>, vector<32x128xf32>, vector<8x128xf32> -> vector<8x128xf32>
    %318 = arith.addf %316, %317 : vector<8x128xf32>
    %319 = vector.broadcast %227 : vector<1x128xf32> to vector<8x128xf32>
    %320 = arith.addf %318, %319 : vector<8x128xf32>
    %321 = tpu.iota {dimensions = array<i32: 1>} : vector<8x128xi32>
    %c64_i32_85 = arith.constant 64 : i32
    %322 = vector.broadcast %c64_i32_85 : i32 to vector<8x128xi32>
    %323 = arith.cmpi sge, %321, %322 : vector<8x128xi32>
    %c96_i32_86 = arith.constant 96 : i32
    %324 = vector.broadcast %c96_i32_86 : i32 to vector<8x128xi32>
    %325 = arith.cmpi slt, %321, %324 : vector<8x128xi32>
    %326 = arith.andi %323, %325 : vector<8x128xi1>
    %cst_87 = arith.constant 5.000000e-01 : f32
    %327 = vector.broadcast %cst_87 : f32 to vector<8x128xf32>
    %328 = arith.mulf %327, %320 : vector<8x128xf32>
    %329 = arith.select %326, %320, %328 : vector<8x128xi1>, vector<8x128xf32>
    %330 = math.tanh %329 : vector<8x128xf32>
    %cst_88 = arith.constant 1.000000e+00 : f32
    %331 = vector.broadcast %cst_88 : f32 to vector<8x128xf32>
    %332 = arith.addf %331, %330 : vector<8x128xf32>
    %cst_89 = arith.constant 5.000000e-01 : f32
    %333 = vector.broadcast %cst_89 : f32 to vector<8x128xf32>
    %334 = arith.mulf %333, %332 : vector<8x128xf32>
    %335 = arith.select %326, %330, %334 : vector<8x128xi1>, vector<8x128xf32>
    %336 = vector.extract_strided_slice %335 {offsets = [0, 0], sizes = [8, 32], strides = [1, 1]} : vector<8x128xf32> to vector<8x32xf32>
    %337 = vector.extract_strided_slice %335 {offsets = [0, 32], sizes = [8, 32], strides = [1, 1]} : vector<8x128xf32> to vector<8x32xf32>
    %338 = vector.extract_strided_slice %335 {offsets = [0, 64], sizes = [8, 32], strides = [1, 1]} : vector<8x128xf32> to vector<8x32xf32>
    %339 = vector.extract_strided_slice %335 {offsets = [0, 96], sizes = [8, 32], strides = [1, 1]} : vector<8x128xf32> to vector<8x32xf32>
    %340 = arith.mulf %337, %259 : vector<8x32xf32>
    %341 = arith.mulf %336, %338 : vector<8x32xf32>
    %342 = arith.addf %340, %341 : vector<8x32xf32>
    %343 = math.tanh %342 : vector<8x32xf32>
    %344 = arith.mulf %339, %343 : vector<8x32xf32>
    %cst_90 = arith.constant dense<0.000000e+00> : vector<8x5xf32>
    %345 = tpu.matmul %344, %228, %cst_90 {dimension_numbers = #tpu.dot_dimension_numbers<[1], [0], [0], [1], [0, 0, 1, 1], [], []>} : vector<8x32xf32>, vector<32x5xf32>, vector<8x5xf32> -> vector<8x5xf32>
    %346 = vector.broadcast %229 : vector<1x5xf32> to vector<8x5xf32>
    %347 = arith.addf %345, %346 : vector<8x5xf32>
    %348 = vector.extract_strided_slice %347 {offsets = [0, 0], sizes = [8, 2], strides = [1, 1]} : vector<8x5xf32> to vector<8x2xf32>
    %349 = arith.addf %348, %266 : vector<8x2xf32>
    %350 = vector.extract_strided_slice %347 {offsets = [0, 2], sizes = [8, 2], strides = [1, 1]} : vector<8x5xf32> to vector<8x2xf32>
    %351 = math.exp %350 : vector<8x2xf32>
    %cst_91 = arith.constant 0.00999999977 : f32
    %352 = vector.broadcast %cst_91 : f32 to vector<8x2xf32>
    %353 = arith.addf %351, %352 : vector<8x2xf32>
    %354 = vector.extract_strided_slice %353 {offsets = [0, 0], sizes = [8, 1], strides = [1, 1]} : vector<8x2xf32> to vector<8x1xf32>
    %355 = vector.extract_strided_slice %353 {offsets = [0, 1], sizes = [8, 1], strides = [1, 1]} : vector<8x2xf32> to vector<8x1xf32>
    %356 = arith.mulf %354, %355 : vector<8x1xf32>
    %357 = math.sqrt %356 : vector<8x1xf32>
    %358 = vector.extract_strided_slice %347 {offsets = [0, 4], sizes = [8, 1], strides = [1, 1]} : vector<8x5xf32> to vector<8x1xf32>
    %359 = math.tanh %358 : vector<8x1xf32>
    %360 = arith.mulf %357, %359 : vector<8x1xf32>
    %361 = tpu.concatenate %349, %353, %360 in 1 : vector<8x2xf32>, vector<8x2xf32>, vector<8x1xf32> -> vector<8x5xf32>
    %362 = arith.addf %279, %361 : vector<8x5xf32>
    %363 = arith.index_cast %c1_i32 : i32 to index
    %c0_92 = arith.constant 0 : index
    %c0_93 = arith.constant 0 : index
    %364 = vector.load %arg2[%363, %c0_92, %c0_93] : memref<3x8x2xf32, #tpu.memory_space<vmem>>, vector<1x8x2xf32>
    %365 = vector.shape_cast %364 : vector<1x8x2xf32> to vector<8x2xf32>
    %366 = vector.extract_strided_slice %362 {offsets = [0, 0], sizes = [8, 2], strides = [1, 1]} : vector<8x5xf32> to vector<8x2xf32>
    %367 = arith.subf %365, %366 : vector<8x2xf32>
    %368 = vector.extract_strided_slice %362 {offsets = [0, 2], sizes = [8, 1], strides = [1, 1]} : vector<8x5xf32> to vector<8x1xf32>
    %369 = vector.broadcast %cst_69 : f32 to vector<8x1xf32>
    %370 = arith.mulf %369, %368 : vector<8x1xf32>
    %371 = vector.extract_strided_slice %362 {offsets = [0, 3], sizes = [8, 1], strides = [1, 1]} : vector<8x5xf32> to vector<8x1xf32>
    %372 = vector.broadcast %cst_69 : f32 to vector<8x1xf32>
    %373 = arith.mulf %372, %371 : vector<8x1xf32>
    %374 = vector.extract_strided_slice %362 {offsets = [0, 4], sizes = [8, 1], strides = [1, 1]} : vector<8x5xf32> to vector<8x1xf32>
    %375 = vector.broadcast %cst_69 : f32 to vector<8x1xf32>
    %376 = arith.mulf %375, %374 : vector<8x1xf32>
    %377 = vector.extract_strided_slice %367 {offsets = [0, 0], sizes = [8, 1], strides = [1, 1]} : vector<8x2xf32> to vector<8x1xf32>
    %378 = vector.extract_strided_slice %367 {offsets = [0, 1], sizes = [8, 1], strides = [1, 1]} : vector<8x2xf32> to vector<8x1xf32>
    %379 = arith.mulf %370, %373 : vector<8x1xf32>
    %380 = arith.mulf %376, %376 : vector<8x1xf32>
    %381 = arith.subf %379, %380 : vector<8x1xf32>
    %382 = tpu.reciprocal %381 {approx = true} : vector<8x1xf32> -> vector<8x1xf32>
    %383 = arith.mulf %377, %377 : vector<8x1xf32>
    %384 = arith.mulf %383, %373 : vector<8x1xf32>
    %385 = arith.mulf %378, %378 : vector<8x1xf32>
    %386 = arith.mulf %385, %370 : vector<8x1xf32>
    %387 = arith.addf %384, %386 : vector<8x1xf32>
    %cst_94 = arith.constant 2.000000e+00 : f32
    %388 = vector.broadcast %cst_94 : f32 to vector<8x1xf32>
    %389 = arith.mulf %388, %376 : vector<8x1xf32>
    %390 = arith.mulf %389, %377 : vector<8x1xf32>
    %391 = arith.mulf %390, %378 : vector<8x1xf32>
    %392 = arith.subf %387, %391 : vector<8x1xf32>
    %393 = arith.mulf %392, %382 : vector<8x1xf32>
    %394 = math.log %381 : vector<8x1xf32>
    %395 = arith.addf %393, %394 : vector<8x1xf32>
    %cst_95 = arith.constant 5.000000e-01 : f32
    %396 = vector.broadcast %cst_95 : f32 to vector<8x1xf32>
    %397 = arith.mulf %396, %395 : vector<8x1xf32>
    %398 = arith.addf %315, %397 : vector<8x1xf32>
    %c2_i32 = arith.constant 2 : i32
    %cst_96 = arith.constant dense<0.000000e+00> : vector<8x128xf32>
    %399 = tpu.matmul %349, %225, %cst_96 {dimension_numbers = #tpu.dot_dimension_numbers<[1], [0], [0], [1], [0, 0, 1, 1], [], []>} : vector<8x2xf32>, vector<2x128xf32>, vector<8x128xf32> -> vector<8x128xf32>
    %cst_97 = arith.constant dense<0.000000e+00> : vector<8x128xf32>
    %400 = tpu.matmul %344, %226, %cst_97 {dimension_numbers = #tpu.dot_dimension_numbers<[1], [0], [0], [1], [0, 0, 1, 1], [], []>} : vector<8x32xf32>, vector<32x128xf32>, vector<8x128xf32> -> vector<8x128xf32>
    %401 = arith.addf %399, %400 : vector<8x128xf32>
    %402 = vector.broadcast %227 : vector<1x128xf32> to vector<8x128xf32>
    %403 = arith.addf %401, %402 : vector<8x128xf32>
    %404 = tpu.iota {dimensions = array<i32: 1>} : vector<8x128xi32>
    %c64_i32_98 = arith.constant 64 : i32
    %405 = vector.broadcast %c64_i32_98 : i32 to vector<8x128xi32>
    %406 = arith.cmpi sge, %404, %405 : vector<8x128xi32>
    %c96_i32_99 = arith.constant 96 : i32
    %407 = vector.broadcast %c96_i32_99 : i32 to vector<8x128xi32>
    %408 = arith.cmpi slt, %404, %407 : vector<8x128xi32>
    %409 = arith.andi %406, %408 : vector<8x128xi1>
    %cst_100 = arith.constant 5.000000e-01 : f32
    %410 = vector.broadcast %cst_100 : f32 to vector<8x128xf32>
    %411 = arith.mulf %410, %403 : vector<8x128xf32>
    %412 = arith.select %409, %403, %411 : vector<8x128xi1>, vector<8x128xf32>
    %413 = math.tanh %412 : vector<8x128xf32>
    %cst_101 = arith.constant 1.000000e+00 : f32
    %414 = vector.broadcast %cst_101 : f32 to vector<8x128xf32>
    %415 = arith.addf %414, %413 : vector<8x128xf32>
    %cst_102 = arith.constant 5.000000e-01 : f32
    %416 = vector.broadcast %cst_102 : f32 to vector<8x128xf32>
    %417 = arith.mulf %416, %415 : vector<8x128xf32>
    %418 = arith.select %409, %413, %417 : vector<8x128xi1>, vector<8x128xf32>
    %419 = vector.extract_strided_slice %418 {offsets = [0, 0], sizes = [8, 32], strides = [1, 1]} : vector<8x128xf32> to vector<8x32xf32>
    %420 = vector.extract_strided_slice %418 {offsets = [0, 32], sizes = [8, 32], strides = [1, 1]} : vector<8x128xf32> to vector<8x32xf32>
    %421 = vector.extract_strided_slice %418 {offsets = [0, 64], sizes = [8, 32], strides = [1, 1]} : vector<8x128xf32> to vector<8x32xf32>
    %422 = vector.extract_strided_slice %418 {offsets = [0, 96], sizes = [8, 32], strides = [1, 1]} : vector<8x128xf32> to vector<8x32xf32>
    %423 = arith.mulf %420, %342 : vector<8x32xf32>
    %424 = arith.mulf %419, %421 : vector<8x32xf32>
    %425 = arith.addf %423, %424 : vector<8x32xf32>
    %426 = math.tanh %425 : vector<8x32xf32>
    %427 = arith.mulf %422, %426 : vector<8x32xf32>
    %cst_103 = arith.constant dense<0.000000e+00> : vector<8x5xf32>
    %428 = tpu.matmul %427, %228, %cst_103 {dimension_numbers = #tpu.dot_dimension_numbers<[1], [0], [0], [1], [0, 0, 1, 1], [], []>} : vector<8x32xf32>, vector<32x5xf32>, vector<8x5xf32> -> vector<8x5xf32>
    %429 = vector.broadcast %229 : vector<1x5xf32> to vector<8x5xf32>
    %430 = arith.addf %428, %429 : vector<8x5xf32>
    %431 = vector.extract_strided_slice %430 {offsets = [0, 0], sizes = [8, 2], strides = [1, 1]} : vector<8x5xf32> to vector<8x2xf32>
    %432 = arith.addf %431, %349 : vector<8x2xf32>
    %433 = vector.extract_strided_slice %430 {offsets = [0, 2], sizes = [8, 2], strides = [1, 1]} : vector<8x5xf32> to vector<8x2xf32>
    %434 = math.exp %433 : vector<8x2xf32>
    %cst_104 = arith.constant 0.00999999977 : f32
    %435 = vector.broadcast %cst_104 : f32 to vector<8x2xf32>
    %436 = arith.addf %434, %435 : vector<8x2xf32>
    %437 = vector.extract_strided_slice %436 {offsets = [0, 0], sizes = [8, 1], strides = [1, 1]} : vector<8x2xf32> to vector<8x1xf32>
    %438 = vector.extract_strided_slice %436 {offsets = [0, 1], sizes = [8, 1], strides = [1, 1]} : vector<8x2xf32> to vector<8x1xf32>
    %439 = arith.mulf %437, %438 : vector<8x1xf32>
    %440 = math.sqrt %439 : vector<8x1xf32>
    %441 = vector.extract_strided_slice %430 {offsets = [0, 4], sizes = [8, 1], strides = [1, 1]} : vector<8x5xf32> to vector<8x1xf32>
    %442 = math.tanh %441 : vector<8x1xf32>
    %443 = arith.mulf %440, %442 : vector<8x1xf32>
    %444 = tpu.concatenate %432, %436, %443 in 1 : vector<8x2xf32>, vector<8x2xf32>, vector<8x1xf32> -> vector<8x5xf32>
    %445 = arith.addf %362, %444 : vector<8x5xf32>
    %446 = arith.index_cast %c2_i32 : i32 to index
    %c0_105 = arith.constant 0 : index
    %c0_106 = arith.constant 0 : index
    %447 = vector.load %arg2[%446, %c0_105, %c0_106] : memref<3x8x2xf32, #tpu.memory_space<vmem>>, vector<1x8x2xf32>
    %448 = vector.shape_cast %447 : vector<1x8x2xf32> to vector<8x2xf32>
    %449 = vector.extract_strided_slice %445 {offsets = [0, 0], sizes = [8, 2], strides = [1, 1]} : vector<8x5xf32> to vector<8x2xf32>
    %450 = arith.subf %448, %449 : vector<8x2xf32>
    %451 = vector.extract_strided_slice %445 {offsets = [0, 2], sizes = [8, 1], strides = [1, 1]} : vector<8x5xf32> to vector<8x1xf32>
    %452 = vector.broadcast %cst_69 : f32 to vector<8x1xf32>
    %453 = arith.mulf %452, %451 : vector<8x1xf32>
    %454 = vector.extract_strided_slice %445 {offsets = [0, 3], sizes = [8, 1], strides = [1, 1]} : vector<8x5xf32> to vector<8x1xf32>
    %455 = vector.broadcast %cst_69 : f32 to vector<8x1xf32>
    %456 = arith.mulf %455, %454 : vector<8x1xf32>
    %457 = vector.extract_strided_slice %445 {offsets = [0, 4], sizes = [8, 1], strides = [1, 1]} : vector<8x5xf32> to vector<8x1xf32>
    %458 = vector.broadcast %cst_69 : f32 to vector<8x1xf32>
    %459 = arith.mulf %458, %457 : vector<8x1xf32>
    %460 = vector.extract_strided_slice %450 {offsets = [0, 0], sizes = [8, 1], strides = [1, 1]} : vector<8x2xf32> to vector<8x1xf32>
    %461 = vector.extract_strided_slice %450 {offsets = [0, 1], sizes = [8, 1], strides = [1, 1]} : vector<8x2xf32> to vector<8x1xf32>
    %462 = arith.mulf %453, %456 : vector<8x1xf32>
    %463 = arith.mulf %459, %459 : vector<8x1xf32>
    %464 = arith.subf %462, %463 : vector<8x1xf32>
    %465 = tpu.reciprocal %464 {approx = true} : vector<8x1xf32> -> vector<8x1xf32>
    %466 = arith.mulf %460, %460 : vector<8x1xf32>
    %467 = arith.mulf %466, %456 : vector<8x1xf32>
    %468 = arith.mulf %461, %461 : vector<8x1xf32>
    %469 = arith.mulf %468, %453 : vector<8x1xf32>
    %470 = arith.addf %467, %469 : vector<8x1xf32>
    %cst_107 = arith.constant 2.000000e+00 : f32
    %471 = vector.broadcast %cst_107 : f32 to vector<8x1xf32>
    %472 = arith.mulf %471, %459 : vector<8x1xf32>
    %473 = arith.mulf %472, %460 : vector<8x1xf32>
    %474 = arith.mulf %473, %461 : vector<8x1xf32>
    %475 = arith.subf %470, %474 : vector<8x1xf32>
    %476 = arith.mulf %475, %465 : vector<8x1xf32>
    %477 = math.log %464 : vector<8x1xf32>
    %478 = arith.addf %476, %477 : vector<8x1xf32>
    %cst_108 = arith.constant 5.000000e-01 : f32
    %479 = vector.broadcast %cst_108 : f32 to vector<8x1xf32>
    %480 = arith.mulf %479, %478 : vector<8x1xf32>
    %481 = arith.addf %398, %480 : vector<8x1xf32>
    %c3_i32 = arith.constant 3 : i32
    %482 = tpu.iota {dimensions = array<i32: 0>} : vector<8x1xi32>
    %c2_i32_109 = arith.constant 2 : i32
    %483 = vector.broadcast %c2_i32_109 : i32 to vector<8x1xi32>
    %484 = arith.cmpi slt, %482, %483 : vector<8x1xi32>
    %cst_110 = arith.constant 0.000000e+00 : f32
    %485 = vector.broadcast %cst_110 : f32 to vector<8x1xf32>
    %486 = arith.select %484, %481, %485 : vector<8x1xi1>, vector<8x1xf32>
    %cst_111 = arith.constant dense<0.000000e+00> : vector<1xf32>
    %487 = vector.multi_reduction <add>, %486, %cst_111 [0] : vector<8x1xf32> to vector<1xf32>
    %488 = vector.shape_cast %487 : vector<1xf32> to vector<1x1xf32>
    %c0_112 = arith.constant 0 : index
    %c0_113 = arith.constant 0 : index
    %489 = vector.load %arg11[%c0_112, %c0_113] : memref<1x1xf32, #tpu.memory_space<vmem>>, vector<1x1xf32>
    tpu.vector_store %arg11[%c0_112, %c0_113], %488 {strides = array<i32>} : memref<1x1xf32, #tpu.memory_space<vmem>>, vector<1x1xf32>,
    return
  }
}

</mosaic_0001>

<llo_original>
// kernel: forward.1
$region0: #{forward.1}
  #allocation0 [shape = 'u32[]', space=smem, size = 0x4, offset = 0x4, fixed_abs, tag = 'smem constant byte address 0x4 - core index']
  #allocation1 [shape = 'u32[144,128]{1,0:T(1,128)}', space=vmem, size = 0x12000, scoped, tag = 'internal scratch']
  %s0 = inlined_call_operand.vmem [shape: f32[64,2], index: 0, kind: input, shape index: {}]
  %s1 = inlined_call_operand.vmem [shape: f32[8,2], index: 1, kind: input, shape index: {}]
  %s2 = inlined_call_operand.vmem [shape: f32[3,8,2], index: 2, kind: input, shape index: {}]
  %s3 = inlined_call_operand.vmem [shape: f32[2,128], index: 3, kind: input, shape index: {}]
  %s4 = inlined_call_operand.vmem [shape: f32[1,128], index: 4, kind: input, shape index: {}]
  %s5 = inlined_call_operand.vmem [shape: f32[32,128], index: 5, kind: input, shape index: {}]
  %s6 = inlined_call_operand.vmem [shape: f32[2,128], index: 6, kind: input, shape index: {}]
  %s7 = inlined_call_operand.vmem [shape: f32[1,128], index: 7, kind: input, shape index: {}]
  %s8 = inlined_call_operand.vmem [shape: f32[32,128], index: 8, kind: input, shape index: {}]
  %s9 = inlined_call_operand.vmem [shape: f32[32,5], index: 9, kind: input, shape index: {}]
  %s10 = inlined_call_operand.vmem [shape: f32[1,5], index: 10, kind: input, shape index: {}]
  %s11 = inlined_call_operand.hbm [shape: f32[1,1], index: 11, kind: output, shape index: {}]
  %s12 = sld [smem:[#allocation0]]
  $region54: #{forward.1} parent=0
    _
  %s14 = ssub.s32 1, %s12
  %s15 = scalar_select 0, %s14, %s12
  $region1: #{forward.1} parent=0
    #allocation2 [shape = 'u8[512]{0}', space=vmem, size = 0x400, scoped, tag = 'output window, operand 0, single buffered']
    #allocation3 [shape = 's32[1]{0}', space=sflag, size = 0x4, scoped, tag = 'scoped memory for forward.1']
    %16 = vsyncpa [#allocation3], 0
    // Predicated region
    $region2: #{forward.1} parent=1 // pred_check
      _
    $region3: #{forward.1} parent=1 // pred_check_branch
      %18 = sbr.rel (0) target = $region5
    $region4: #{forward.1} parent=1 // pred_region
      _
    $region5: #{forward.1} parent=1 // pred_fallthru
      _
    // Predicated region
    $region6: #{forward.1} parent=1 // pred_check
      _
    $region7: #{forward.1} parent=1 // pred_check_branch
      %20 = sbr.rel (0) target = $region9
    $region8: #{forward.1} parent=1 // pred_region
      _
    $region9: #{forward.1} parent=1 // pred_fallthru
      _
    // Predicated region
    $region10: #{forward.1} parent=1 // pred_check
      _
    $region11: #{forward.1} parent=1 // pred_check_branch
      %22 = sbr.rel (0) target = $region13
    $region12: #{forward.1} parent=1 // pred_region
      _
    $region13: #{forward.1} parent=1 // pred_fallthru
      _
    // Predicated region
    $region14: #{forward.1} parent=1 // pred_check
      _
    $region15: #{forward.1} parent=1 // pred_check_branch
      %24 = sbr.rel (0) target = $region17
    $region16: #{forward.1} parent=1 // pred_region
      _
    $region17: #{forward.1} parent=1 // pred_fallthru
      _
    // Predicated region
    $region18: #{forward.1} parent=1 // pred_check
      _
    $region19: #{forward.1} parent=1 // pred_check_branch
      %26 = sbr.rel (0) target = $region21
    $region20: #{forward.1} parent=1 // pred_region
      _
    $region21: #{forward.1} parent=1 // pred_fallthru
      _
    // Predicated region
    $region22: #{forward.1} parent=1 // pred_check
      _
    $region23: #{forward.1} parent=1 // pred_check_branch
      %28 = sbr.rel (0) target = $region25
    $region24: #{forward.1} parent=1 // pred_region
      _
    $region25: #{forward.1} parent=1 // pred_fallthru
      _
    // Predicated region
    $region26: #{forward.1} parent=1 // pred_check
      _
    $region27: #{forward.1} parent=1 // pred_check_branch
      %30 = sbr.rel (0) target = $region29
    $region28: #{forward.1} parent=1 // pred_region
      _
    $region29: #{forward.1} parent=1 // pred_fallthru
      _
    // Predicated region
    $region30: #{forward.1} parent=1 // pred_check
      _
    $region31: #{forward.1} parent=1 // pred_check_branch
      %32 = sbr.rel (0) target = $region33
    $region32: #{forward.1} parent=1 // pred_region
      _
    $region33: #{forward.1} parent=1 // pred_fallthru
      _
    // Predicated region
    $region34: #{forward.1} parent=1 // pred_check
      _
    $region35: #{forward.1} parent=1 // pred_check_branch
      %34 = sbr.rel (0) target = $region37
    $region36: #{forward.1} parent=1 // pred_region
      _
    $region37: #{forward.1} parent=1 // pred_fallthru
      _
    // Predicated region
    $region38: #{forward.1} parent=1 // pred_check
      _
    $region39: #{forward.1} parent=1 // pred_check_branch
      %36 = sbr.rel (0) target = $region41
    $region40: #{forward.1} parent=1 // pred_region
      _
    $region41: #{forward.1} parent=1 // pred_fallthru
      _
    // Predicated region
    $region42: #{forward.1} parent=1 // pred_check
      _
    $region43: #{forward.1} parent=1 // pred_check_branch
      %38 = sbr.rel (0) target = $region45
    $region44: #{forward.1} parent=1 // pred_region
      _
    $region45: #{forward.1} parent=1 // pred_fallthru
      _
    %v39 = vld [vmem:[%s0] sm:$0xff]
    %v40 = vld [vmem:[%s0 + $0x8] sm:$0xff]
    %v41 = vld [vmem:[%s0 + $0x10] sm:$0xff]
    %v42 = vld [vmem:[%s0 + $0x18] sm:$0xff]
    %v43 = vld [vmem:[%s0 + $0x20] sm:$0xff]
    %v44 = vld [vmem:[%s0 + $0x28] sm:$0xff]
    %v45 = vld [vmem:[%s0 + $0x30] sm:$0xff]
    %v46 = vld [vmem:[%s0 + $0x38] sm:$0xff]
    %v47 = vld [vmem:[%s3] sm:$0x3]
    %v48 = vld [vmem:[%s4] sm:$0x1]
    %v50 = vlaneseq
    %v51 = vshrl.u32 %v50, 7
    %v52 = vsub.s32 0, %v51
    %v53 = vrot.slane %v48, %v52
    %vm55 = vcmask 15360
    %v57 = vsel %vm55, %v39, 0
    %v60 = vsel %vm55, %v40, 0
    %v63 = vsel %vm55, %v41, 0
    %v66 = vsel %vm55, %v42, 0
    %v69 = vsel %vm55, %v43, 0
    %v72 = vsel %vm55, %v44, 0
    %v75 = vsel %vm55, %v45, 0
    %v78 = vsel %vm55, %v46, 0
    %vm80 = vcmask 1041408
    %v82 = vsel %vm80, %v47, 0
    %84 = vmatprep.subr.mxu0 0.0
    %85 = vmatpush1.msra.mxu0 0.0
    %86 = vmatprep.subr.mxu0 0.0
    %87 = vmatpush1.msra.mxu0 0.0
    %88 = vmatprep.subr.mxu0 0.0
    %89 = vmatpush1.msra.mxu0 0.0
    %90 = vmatprep.subr.mxu0 0.0
    %91 = vmatpush1.msra.mxu0 0.0
    %92 = vmatprep.subr.mxu0 0.0
    %93 = vmatpush1.msra.mxu0 0.0
    %94 = vmatprep.subr.mxu0 0.0
    %95 = vmatpush1.msra.mxu0 0.0
    %96 = vmatprep.subr.mxu0 0.0
    %97 = vmatpush1.msra.mxu0 0.0
    %98 = vmatprep.subr.mxu0 0.0
    %99 = vmatpush1.msra.mxu0 0.0
    %100 = vmatprep.subr.mxu0 0.0
    %101 = vmatpush1.msra.mxu0 0.0
    %102 = vmatprep.subr.mxu0 0.0
    %103 = vmatpush1.msra.mxu0 0.0
    %104 = vmatprep.subr.mxu0 0.0
    %105 = vmatpush1.msra.mxu0 0.0
    %106 = vmatprep.subr.mxu0 0.0
    %107 = vmatpush1.msra.mxu0 0.0
    %108 = vmatprep.subr.mxu0 0.0
    %109 = vmatpush1.msra.mxu0 0.0
    %110 = vmatprep.subr.mxu0 0.0
    %111 = vmatpush1.msra.mxu0 0.0
    %112 = vmatprep.subr.mxu0 0.0
    %113 = vmatpush1.msra.mxu0 0.0
    %114 = vmatprep.subr.mxu0 0.0
    %115 = vmatpush1.msra.mxu0 %v82
    %116 = vmatprep.subr.mxu0 0.0
    %117 = vmatpush2.msra.mxu0 0.0
    %118 = vmatprep.subr.mxu0 0.0
    %119 = vmatpush2.msra.mxu0 0.0
    %120 = vmatprep.subr.mxu0 0.0
    %121 = vmatpush2.msra.mxu0 0.0
    %122 = vmatprep.subr.mxu0 0.0
    %123 = vmatpush2.msra.mxu0 0.0
    %124 = vmatprep.subr.mxu0 0.0
    %125 = vmatpush2.msra.mxu0 0.0
    %126 = vmatprep.subr.mxu0 0.0
    %127 = vmatpush2.msra.mxu0 0.0
    %128 = vmatprep.subr.mxu0 0.0
    %129 = vmatpush2.msra.mxu0 0.0
    %130 = vmatprep.subr.mxu0 0.0
    %131 = vmatpush2.msra.mxu0 0.0
    %132 = vmatprep.subr.mxu0 0.0
    %133 = vmatpush2.msra.mxu0 0.0
    %134 = vmatprep.subr.mxu0 0.0
    %135 = vmatpush2.msra.mxu0 0.0
    %136 = vmatprep.subr.mxu0 0.0
    %137 = vmatpush2.msra.mxu0 0.0
    %138 = vmatprep.subr.mxu0 0.0
    %139 = vmatpush2.msra.mxu0 0.0
    %140 = vmatprep.subr.mxu0 0.0
    %141 = vmatpush2.msra.mxu0 0.0
    %142 = vmatprep.subr.mxu0 0.0
    %143 = vmatpush2.msra.mxu0 0.0
    %144 = vmatprep.subr.mxu0 0.0
    %145 = vmatpush2.msra.mxu0 0.0
    %146 = vmatprep.subr.mxu0 0.0
    %147 = vmatpush2.msra.mxu0 0.0
    %148 = vmatprep.mubr.f32.mxu0 0.0
    %149 = vmatmul.mubr.f32.gmra.mxu0 %v57
    %v150 = vpop.f32.mrf.mxu0
    %v151 = vadd.f32 %v53, %v150
    %v152 = vpop.f32.mrf.mxu0
    %153 = vmatprep.mubr.f32.mxu0 0.0
    %154 = vmatmul.mubr.f32.gmra.mxu0 %v60
    %v155 = vpop.f32.mrf.mxu0
    %v156 = vadd.f32 %v53, %v155
    %v157 = vpop.f32.mrf.mxu0
    %158 = vmatprep.mubr.f32.mxu0 0.0
    %159 = vmatmul.mubr.f32.gmra.mxu0 %v63
    %v160 = vpop.f32.mrf.mxu0
    %v161 = vadd.f32 %v53, %v160
    %v162 = vpop.f32.mrf.mxu0
    %163 = vmatprep.mubr.f32.mxu0 0.0
    %164 = vmatmul.mubr.f32.gmra.mxu0 %v66
    %v165 = vpop.f32.mrf.mxu0
    %v166 = vadd.f32 %v53, %v165
    %v167 = vpop.f32.mrf.mxu0
    %168 = vmatprep.mubr.f32.mxu0 0.0
    %169 = vmatmul.mubr.f32.gmra.mxu0 %v69
    %v170 = vpop.f32.mrf.mxu0
    %v171 = vadd.f32 %v53, %v170
    %v172 = vpop.f32.mrf.mxu0
    %173 = vmatprep.mubr.f32.mxu0 0.0
    %174 = vmatmul.mubr.f32.gmra.mxu0 %v72
    %v175 = vpop.f32.mrf.mxu0
    %v176 = vadd.f32 %v53, %v175
    %v177 = vpop.f32.mrf.mxu0
    %178 = vmatprep.mubr.f32.mxu0 0.0
    %179 = vmatmul.mubr.f32.gmra.mxu0 %v75
    %v180 = vpop.f32.mrf.mxu0
    %v181 = vadd.f32 %v53, %v180
    %v182 = vpop.f32.mrf.mxu0
    %183 = vmatprep.mubr.f32.mxu0 0.0
    %184 = vmatmul.mubr.f32.gmra.mxu0 %v78
    %v185 = vpop.f32.mrf.mxu0
    %v186 = vadd.f32 %v53, %v185
    %v187 = vpop.f32.mrf.mxu0
    %188 = vdwg.mxu0
    %v189 = vld [vmem:[%s5] sm:$0xff]
    %v190 = vld [vmem:[%s5 + $0x8] sm:$0xff]
    %v191 = vld [vmem:[%s5 + $0x10] sm:$0xff]
    %v192 = vld [vmem:[%s5 + $0x18] sm:$0xff]
    %vm193 = vcmask 261120
    %v195 = vsel %vm193, 0.0, 0
    %197 = vmatprep.subr.mxu0 0.0
    %198 = vmatpush1.msra.mxu0 0.0
    %199 = vmatprep.subr.mxu0 0.0
    %200 = vmatpush1.msra.mxu0 0.0
    %201 = vmatprep.subr.mxu0 0.0
    %202 = vmatpush1.msra.mxu0 0.0
    %203 = vmatprep.subr.mxu0 0.0
    %204 = vmatpush1.msra.mxu0 0.0
    %205 = vmatprep.subr.mxu0 0.0
    %206 = vmatpush1.msra.mxu0 0.0
    %207 = vmatprep.subr.mxu0 0.0
    %208 = vmatpush1.msra.mxu0 0.0
    %209 = vmatprep.subr.mxu0 0.0
    %210 = vmatpush1.msra.mxu0 0.0
    %211 = vmatprep.subr.mxu0 0.0
    %212 = vmatpush1.msra.mxu0 0.0
    %213 = vmatprep.subr.mxu0 0.0
    %214 = vmatpush1.msra.mxu0 0.0
    %215 = vmatprep.subr.mxu0 0.0
    %216 = vmatpush1.msra.mxu0 0.0
    %217 = vmatprep.subr.mxu0 0.0
    %218 = vmatpush1.msra.mxu0 0.0
    %219 = vmatprep.subr.mxu0 0.0
    %220 = vmatpush1.msra.mxu0 0.0
    %221 = vmatprep.subr.mxu0 0.0
    %222 = vmatpush1.msra.mxu0 %v192
    %223 = vmatprep.subr.mxu0 0.0
    %224 = vmatpush1.msra.mxu0 %v191
    %225 = vmatprep.subr.mxu0 0.0
    %226 = vmatpush1.msra.mxu0 %v190
    %227 = vmatprep.subr.mxu0 0.0
    %228 = vmatpush1.msra.mxu0 %v189
    %229 = vmatprep.subr.mxu0 0.0
    %230 = vmatpush2.msra.mxu0 0.0
    %231 = vmatprep.subr.mxu0 0.0
    %232 = vmatpush2.msra.mxu0 0.0
    %233 = vmatprep.subr.mxu0 0.0
    %234 = vmatpush2.msra.mxu0 0.0
    %235 = vmatprep.subr.mxu0 0.0
    %236 = vmatpush2.msra.mxu0 0.0
    %237 = vmatprep.subr.mxu0 0.0
    %238 = vmatpush2.msra.mxu0 0.0
    %239 = vmatprep.subr.mxu0 0.0
    %240 = vmatpush2.msra.mxu0 0.0
    %241 = vmatprep.subr.mxu0 0.0
    %242 = vmatpush2.msra.mxu0 0.0
    %243 = vmatprep.subr.mxu0 0.0
    %244 = vmatpush2.msra.mxu0 0.0
    %245 = vmatprep.subr.mxu0 0.0
    %246 = vmatpush2.msra.mxu0 0.0
    %247 = vmatprep.subr.mxu0 0.0
    %248 = vmatpush2.msra.mxu0 0.0
    %249 = vmatprep.subr.mxu0 0.0
    %250 = vmatpush2.msra.mxu0 0.0
    %251 = vmatprep.subr.mxu0 0.0
    %252 = vmatpush2.msra.mxu0 0.0
    %253 = vmatprep.subr.mxu0 0.0
    %254 = vmatpush2.msra.mxu0 0.0
    %255 = vmatprep.subr.mxu0 0.0
    %256 = vmatpush2.msra.mxu0 0.0
    %257 = vmatprep.subr.mxu0 0.0
    %258 = vmatpush2.msra.mxu0 0.0
    %259 = vmatprep.subr.mxu0 0.0
    %260 = vmatpush2.msra.mxu0 0.0
    %261 = vmatprep.mubr.f32.mxu0 0.0
    %262 = vmatmul.mubr.f32.gmra.mxu0 %v195
    %v263 = vpop.f32.mrf.mxu0
    %v264 = vadd.f32 0.0, %v263
    %v265 = vpop.f32.mrf.mxu0
    %266 = vdwg.mxu0
    %v267 = vadd.f32 %v151, %v264
    %v268 = vlaneseq
    %v269 = vand.u32 %v268, 127
    %vm270 = vcmp.ge.s32.totalorder %v269, 64
    %vm271 = vcmp.lt.s32.totalorder %v269, 96
    %vm272 = vmand %vm270, %vm271
    %v273 = vmul.f32 %v267, 0.5
    %v274 = vsel %vm272, %v267, %v273
    %v275 = vtanh.pop %v274
    %v276 = vadd.f32 %v275, 1.0
    %v277 = vmul.f32 %v276, 0.5
    %v278 = vsel %vm272, %v275, %v277
    %v279 = vmul.f32 %v278, 0.0
    %281 = vrot.lane.b32.xlu0 %v278, 64
    %v282 = vpop.permute.xlu0 %281
    %v284 = vmul.f32 %v278, %v282
    %286 = vrot.lane.b32.xlu0 %v284, 32
    %v287 = vpop.permute.xlu0 %286
    %v289 = vadd.f32 %v279, %v287
    %v290 = vtanh.pop %v289
    %292 = vrot.lane.b32.xlu0 %v290, 64
    %v293 = vpop.permute.xlu0 %292
    %v295 = vmul.f32 %v278, %v293
    %297 = vrot.lane.b32.xlu0 %v295, 32
    %v298 = vpop.permute.xlu0 %297
    %v299 = vsel %vm193, %v298, 0
    %301 = vmatprep.subr.mxu0 0.0
    %302 = vmatpush1.msra.mxu0 0.0
    %303 = vmatprep.subr.mxu0 0.0
    %304 = vmatpush1.msra.mxu0 0.0
    %305 = vmatprep.subr.mxu0 0.0
    %306 = vmatpush1.msra.mxu0 0.0
    %307 = vmatprep.subr.mxu0 0.0
    %308 = vmatpush1.msra.mxu0 0.0
    %309 = vmatprep.subr.mxu0 0.0
    %310 = vmatpush1.msra.mxu0 0.0
    %311 = vmatprep.subr.mxu0 0.0
    %312 = vmatpush1.msra.mxu0 0.0
    %313 = vmatprep.subr.mxu0 0.0
    %314 = vmatpush1.msra.mxu0 0.0
    %315 = vmatprep.subr.mxu0 0.0
    %316 = vmatpush1.msra.mxu0 0.0
    %317 = vmatprep.subr.mxu0 0.0
    %318 = vmatpush1.msra.mxu0 0.0
    %319 = vmatprep.subr.mxu0 0.0
    %320 = vmatpush1.msra.mxu0 0.0
    %321 = vmatprep.subr.mxu0 0.0
    %322 = vmatpush1.msra.mxu0 0.0
    %323 = vmatprep.subr.mxu0 0.0
    %324 = vmatpush1.msra.mxu0 0.0
    %325 = vmatprep.subr.mxu0 0.0
    %326 = vmatpush1.msra.mxu0 %v192
    %327 = vmatprep.subr.mxu0 0.0
    %328 = vmatpush1.msra.mxu0 %v191
    %329 = vmatprep.subr.mxu0 0.0
    %330 = vmatpush1.msra.mxu0 %v190
    %331 = vmatprep.subr.mxu0 0.0
    %332 = vmatpush1.msra.mxu0 %v189
    %333 = vmatprep.subr.mxu0 0.0
    %334 = vmatpush2.msra.mxu0 0.0
    %335 = vmatprep.subr.mxu0 0.0
    %336 = vmatpush2.msra.mxu0 0.0
    %337 = vmatprep.subr.mxu0 0.0
    %338 = vmatpush2.msra.mxu0 0.0
    %339 = vmatprep.subr.mxu0 0.0
    %340 = vmatpush2.msra.mxu0 0.0
    %341 = vmatprep.subr.mxu0 0.0
    %342 = vmatpush2.msra.mxu0 0.0
    %343 = vmatprep.subr.mxu0 0.0
    %344 = vmatpush2.msra.mxu0 0.0
    %345 = vmatprep.subr.mxu0 0.0
    %346 = vmatpush2.msra.mxu0 0.0
    %347 = vmatprep.subr.mxu0 0.0
    %348 = vmatpush2.msra.mxu0 0.0
    %349 = vmatprep.subr.mxu0 0.0
    %350 = vmatpush2.msra.mxu0 0.0
    %351 = vmatprep.subr.mxu0 0.0
    %352 = vmatpush2.msra.mxu0 0.0
    %353 = vmatprep.subr.mxu0 0.0
    %354 = vmatpush2.msra.mxu0 0.0
    %355 = vmatprep.subr.mxu0 0.0
    %356 = vmatpush2.msra.mxu0 0.0
    %357 = vmatprep.subr.mxu0 0.0
    %358 = vmatpush2.msra.mxu0 0.0
    %359 = vmatprep.subr.mxu0 0.0
    %360 = vmatpush2.msra.mxu0 0.0
    %361 = vmatprep.subr.mxu0 0.0
    %362 = vmatpush2.msra.mxu0 0.0
    %363 = vmatprep.subr.mxu0 0.0
    %364 = vmatpush2.msra.mxu0 0.0
    %365 = vmatprep.mubr.f32.mxu0 0.0
    %366 = vmatmul.mubr.f32.gmra.mxu0 %v299
    %v367 = vpop.f32.mrf.mxu0
    %v368 = vadd.f32 0.0, %v367
    %v369 = vpop.f32.mrf.mxu0
    %370 = vdwg.mxu0
    %v371 = vadd.f32 %v156, %v368
    %v372 = vmul.f32 %v371, 0.5
    %v373 = vsel %vm272, %v371, %v372
    %v374 = vtanh.pop %v373
    %v375 = vadd.f32 %v374, 1.0
    %v376 = vmul.f32 %v375, 0.5
    %v377 = vsel %vm272, %v374, %v376
    %v378 = vmul.f32 %v377, %v289
    %380 = vrot.lane.b32.xlu0 %v377, 64
    %v381 = vpop.permute.xlu0 %380
    %v383 = vmul.f32 %v377, %v381
    %385 = vrot.lane.b32.xlu0 %v383, 32
    %v386 = vpop.permute.xlu0 %385
    %v388 = vadd.f32 %v378, %v386
    %v389 = vtanh.pop %v388
    %391 = vrot.lane.b32.xlu0 %v389, 64
    %v392 = vpop.permute.xlu0 %391
    %v394 = vmul.f32 %v377, %v392
    %396 = vrot.lane.b32.xlu0 %v394, 32
    %v397 = vpop.permute.xlu0 %396
    %v398 = vsel %vm193, %v397, 0
    %400 = vmatprep.subr.mxu0 0.0
    %401 = vmatpush1.msra.mxu0 0.0
    %402 = vmatprep.subr.mxu0 0.0
    %403 = vmatpush1.msra.mxu0 0.0
    %404 = vmatprep.subr.mxu0 0.0
    %405 = vmatpush1.msra.mxu0 0.0
    %406 = vmatprep.subr.mxu0 0.0
    %407 = vmatpush1.msra.mxu0 0.0
    %408 = vmatprep.subr.mxu0 0.0
    %409 = vmatpush1.msra.mxu0 0.0
    %410 = vmatprep.subr.mxu0 0.0
    %411 = vmatpush1.msra.mxu0 0.0
    %412 = vmatprep.subr.mxu0 0.0
    %413 = vmatpush1.msra.mxu0 0.0
    %414 = vmatprep.subr.mxu0 0.0
    %415 = vmatpush1.msra.mxu0 0.0
    %416 = vmatprep.subr.mxu0 0.0
    %417 = vmatpush1.msra.mxu0 0.0
    %418 = vmatprep.subr.mxu0 0.0
    %419 = vmatpush1.msra.mxu0 0.0
    %420 = vmatprep.subr.mxu0 0.0
    %421 = vmatpush1.msra.mxu0 0.0
    %422 = vmatprep.subr.mxu0 0.0
    %423 = vmatpush1.msra.mxu0 0.0
    %424 = vmatprep.subr.mxu0 0.0
    %425 = vmatpush1.msra.mxu0 %v192
    %426 = vmatprep.subr.mxu0 0.0
    %427 = vmatpush1.msra.mxu0 %v191
    %428 = vmatprep.subr.mxu0 0.0
    %429 = vmatpush1.msra.mxu0 %v190
    %430 = vmatprep.subr.mxu0 0.0
    %431 = vmatpush1.msra.mxu0 %v189
    %432 = vmatprep.subr.mxu0 0.0
    %433 = vmatpush2.msra.mxu0 0.0
    %434 = vmatprep.subr.mxu0 0.0
    %435 = vmatpush2.msra.mxu0 0.0
    %436 = vmatprep.subr.mxu0 0.0
    %437 = vmatpush2.msra.mxu0 0.0
    %438 = vmatprep.subr.mxu0 0.0
    %439 = vmatpush2.msra.mxu0 0.0
    %440 = vmatprep.subr.mxu0 0.0
    %441 = vmatpush2.msra.mxu0 0.0
    %442 = vmatprep.subr.mxu0 0.0
    %443 = vmatpush2.msra.mxu0 0.0
    %444 = vmatprep.subr.mxu0 0.0
    %445 = vmatpush2.msra.mxu0 0.0
    %446 = vmatprep.subr.mxu0 0.0
    %447 = vmatpush2.msra.mxu0 0.0
    %448 = vmatprep.subr.mxu0 0.0
    %449 = vmatpush2.msra.mxu0 0.0
    %450 = vmatprep.subr.mxu0 0.0
    %451 = vmatpush2.msra.mxu0 0.0
    %452 = vmatprep.subr.mxu0 0.0
    %453 = vmatpush2.msra.mxu0 0.0
    %454 = vmatprep.subr.mxu0 0.0
    %455 = vmatpush2.msra.mxu0 0.0
    %456 = vmatprep.subr.mxu0 0.0
    %457 = vmatpush2.msra.mxu0 0.0
    %458 = vmatprep.subr.mxu0 0.0
    %459 = vmatpush2.msra.mxu0 0.0
    %460 = vmatprep.subr.mxu0 0.0
    %461 = vmatpush2.msra.mxu0 0.0
    %462 = vmatprep.subr.mxu0 0.0
    %463 = vmatpush2.msra.mxu0 0.0
    %464 = vmatprep.mubr.f32.mxu0 0.0
    %465 = vmatmul.mubr.f32.gmra.mxu0 %v398
    %v466 = vpop.f32.mrf.mxu0
    %v467 = vadd.f32 0.0, %v466
    %v468 = vpop.f32.mrf.mxu0
    %469 = vdwg.mxu0
    %v470 = vadd.f32 %v161, %v467
    %v471 = vmul.f32 %v470, 0.5
    %v472 = vsel %vm272, %v470, %v471
    %v473 = vtanh.pop %v472
    %v474 = vadd.f32 %v473, 1.0
    %v475 = vmul.f32 %v474, 0.5
    %v476 = vsel %vm272, %v473, %v475
    %v477 = vmul.f32 %v476, %v388
    %479 = vrot.lane.b32.xlu0 %v476, 64
    %v480 = vpop.permute.xlu0 %479
    %v482 = vmul.f32 %v476, %v480
    %484 = vrot.lane.b32.xlu0 %v482, 32
    %v485 = vpop.permute.xlu0 %484
    %v487 = vadd.f32 %v477, %v485
    %v488 = vtanh.pop %v487
    %490 = vrot.lane.b32.xlu0 %v488, 64
    %v491 = vpop.permute.xlu0 %490
    %v493 = vmul.f32 %v476, %v491
    %495 = vrot.lane.b32.xlu0 %v493, 32
    %v496 = vpop.permute.xlu0 %495
    %v497 = vsel %vm193, %v496, 0
    %499 = vmatprep.subr.mxu0 0.0
    %500 = vmatpush1.msra.mxu0 0.0
    %501 = vmatprep.subr.mxu0 0.0
    %502 = vmatpush1.msra.mxu0 0.0
    %503 = vmatprep.subr.mxu0 0.0
    %504 = vmatpush1.msra.mxu0 0.0
    %505 = vmatprep.subr.mxu0 0.0
    %506 = vmatpush1.msra.mxu0 0.0
    %507 = vmatprep.subr.mxu0 0.0
    %508 = vmatpush1.msra.mxu0 0.0
    %509 = vmatprep.subr.mxu0 0.0
    %510 = vmatpush1.msra.mxu0 0.0
    %511 = vmatprep.subr.mxu0 0.0
    %512 = vmatpush1.msra.mxu0 0.0
    %513 = vmatprep.subr.mxu0 0.0
    %514 = vmatpush1.msra.mxu0 0.0
    %515 = vmatprep.subr.mxu0 0.0
    %516 = vmatpush1.msra.mxu0 0.0
    %517 = vmatprep.subr.mxu0 0.0
    %518 = vmatpush1.msra.mxu0 0.0
    %519 = vmatprep.subr.mxu0 0.0
    %520 = vmatpush1.msra.mxu0 0.0
    %521 = vmatprep.subr.mxu0 0.0
    %522 = vmatpush1.msra.mxu0 0.0
    %523 = vmatprep.subr.mxu0 0.0
    %524 = vmatpush1.msra.mxu0 %v192
    %525 = vmatprep.subr.mxu0 0.0
    %526 = vmatpush1.msra.mxu0 %v191
    %527 = vmatprep.subr.mxu0 0.0
    %528 = vmatpush1.msra.mxu0 %v190
    %529 = vmatprep.subr.mxu0 0.0
    %530 = vmatpush1.msra.mxu0 %v189
    %531 = vmatprep.subr.mxu0 0.0
    %532 = vmatpush2.msra.mxu0 0.0
    %533 = vmatprep.subr.mxu0 0.0
    %534 = vmatpush2.msra.mxu0 0.0
    %535 = vmatprep.subr.mxu0 0.0
    %536 = vmatpush2.msra.mxu0 0.0
    %537 = vmatprep.subr.mxu0 0.0
    %538 = vmatpush2.msra.mxu0 0.0
    %539 = vmatprep.subr.mxu0 0.0
    %540 = vmatpush2.msra.mxu0 0.0
    %541 = vmatprep.subr.mxu0 0.0
    %542 = vmatpush2.msra.mxu0 0.0
    %543 = vmatprep.subr.mxu0 0.0
    %544 = vmatpush2.msra.mxu0 0.0
    %545 = vmatprep.subr.mxu0 0.0
    %546 = vmatpush2.msra.mxu0 0.0
    %547 = vmatprep.subr.mxu0 0.0
    %548 = vmatpush2.msra.mxu0 0.0
    %549 = vmatprep.subr.mxu0 0.0
    %550 = vmatpush2.msra.mxu0 0.0
    %551 = vmatprep.subr.mxu0 0.0
    %552 = vmatpush2.msra.mxu0 0.0
    %553 = vmatprep.subr.mxu0 0.0
    %554 = vmatpush2.msra.mxu0 0.0
    %555 = vmatprep.subr.mxu0 0.0
    %556 = vmatpush2.msra.mxu0 0.0
    %557 = vmatprep.subr.mxu0 0.0
    %558 = vmatpush2.msra.mxu0 0.0
    %559 = vmatprep.subr.mxu0 0.0
    %560 = vmatpush2.msra.mxu0 0.0
    %561 = vmatprep.subr.mxu0 0.0
    %562 = vmatpush2.msra.mxu0 0.0
    %563 = vmatprep.mubr.f32.mxu0 0.0
    %564 = vmatmul.mubr.f32.gmra.mxu0 %v497
    %v565 = vpop.f32.mrf.mxu0
    %v566 = vadd.f32 0.0, %v565
    %v567 = vpop.f32.mrf.mxu0
    %568 = vdwg.mxu0
    %v569 = vadd.f32 %v166, %v566
    %v570 = vmul.f32 %v569, 0.5
    %v571 = vsel %vm272, %v569, %v570
    %v572 = vtanh.pop %v571
    %v573 = vadd.f32 %v572, 1.0
    %v574 = vmul.f32 %v573, 0.5
    %v575 = vsel %vm272, %v572, %v574
    %v576 = vmul.f32 %v575, %v487
    %578 = vrot.lane.b32.xlu0 %v575, 64
    %v579 = vpop.permute.xlu0 %578
    %v581 = vmul.f32 %v575, %v579
    %583 = vrot.lane.b32.xlu0 %v581, 32
    %v584 = vpop.permute.xlu0 %583
    %v586 = vadd.f32 %v576, %v584
    %v587 = vtanh.pop %v586
    %589 = vrot.lane.b32.xlu0 %v587, 64
    %v590 = vpop.permute.xlu0 %589
    %v592 = vmul.f32 %v575, %v590
    %594 = vrot.lane.b32.xlu0 %v592, 32
    %v595 = vpop.permute.xlu0 %594
    %v596 = vsel %vm193, %v595, 0
    %598 = vmatprep.subr.mxu0 0.0
    %599 = vmatpush1.msra.mxu0 0.0
    %600 = vmatprep.subr.mxu0 0.0
    %601 = vmatpush1.msra.mxu0 0.0
    %602 = vmatprep.subr.mxu0 0.0
    %603 = vmatpush1.msra.mxu0 0.0
    %604 = vmatprep.subr.mxu0 0.0
    %605 = vmatpush1.msra.mxu0 0.0
    %606 = vmatprep.subr.mxu0 0.0
    %607 = vmatpush1.msra.mxu0 0.0
    %608 = vmatprep.subr.mxu0 0.0
    %609 = vmatpush1.msra.mxu0 0.0
    %610 = vmatprep.subr.mxu0 0.0
    %611 = vmatpush1.msra.mxu0 0.0
    %612 = vmatprep.subr.mxu0 0.0
    %613 = vmatpush1.msra.mxu0 0.0
    %614 = vmatprep.subr.mxu0 0.0
    %615 = vmatpush1.msra.mxu0 0.0
    %616 = vmatprep.subr.mxu0 0.0
    %617 = vmatpush1.msra.mxu0 0.0
    %618 = vmatprep.subr.mxu0 0.0
    %619 = vmatpush1.msra.mxu0 0.0
    %620 = vmatprep.subr.mxu0 0.0
    %621 = vmatpush1.msra.mxu0 0.0
    %622 = vmatprep.subr.mxu0 0.0
    %623 = vmatpush1.msra.mxu0 %v192
    %624 = vmatprep.subr.mxu0 0.0
    %625 = vmatpush1.msra.mxu0 %v191
    %626 = vmatprep.subr.mxu0 0.0
    %627 = vmatpush1.msra.mxu0 %v190
    %628 = vmatprep.subr.mxu0 0.0
    %629 = vmatpush1.msra.mxu0 %v189
    %630 = vmatprep.subr.mxu0 0.0
    %631 = vmatpush2.msra.mxu0 0.0
    %632 = vmatprep.subr.mxu0 0.0
    %633 = vmatpush2.msra.mxu0 0.0
    %634 = vmatprep.subr.mxu0 0.0
    %635 = vmatpush2.msra.mxu0 0.0
    %636 = vmatprep.subr.mxu0 0.0
    %637 = vmatpush2.msra.mxu0 0.0
    %638 = vmatprep.subr.mxu0 0.0
    %639 = vmatpush2.msra.mxu0 0.0
    %640 = vmatprep.subr.mxu0 0.0
    %641 = vmatpush2.msra.mxu0 0.0
    %642 = vmatprep.subr.mxu0 0.0
    %643 = vmatpush2.msra.mxu0 0.0
    %644 = vmatprep.subr.mxu0 0.0
    %645 = vmatpush2.msra.mxu0 0.0
    %646 = vmatprep.subr.mxu0 0.0
    %647 = vmatpush2.msra.mxu0 0.0
    %648 = vmatprep.subr.mxu0 0.0
    %649 = vmatpush2.msra.mxu0 0.0
    %650 = vmatprep.subr.mxu0 0.0
    %651 = vmatpush2.msra.mxu0 0.0
    %652 = vmatprep.subr.mxu0 0.0
    %653 = vmatpush2.msra.mxu0 0.0
    %654 = vmatprep.subr.mxu0 0.0
    %655 = vmatpush2.msra.mxu0 0.0
    %656 = vmatprep.subr.mxu0 0.0
    %657 = vmatpush2.msra.mxu0 0.0
    %658 = vmatprep.subr.mxu0 0.0
    %659 = vmatpush2.msra.mxu0 0.0
    %660 = vmatprep.subr.mxu0 0.0
    %661 = vmatpush2.msra.mxu0 0.0
    %662 = vmatprep.mubr.f32.mxu0 0.0
    %663 = vmatmul.mubr.f32.gmra.mxu0 %v596
    %v664 = vpop.f32.mrf.mxu0
    %v665 = vadd.f32 0.0, %v664
    %v666 = vpop.f32.mrf.mxu0
    %667 = vdwg.mxu0
    %v668 = vadd.f32 %v171, %v665
    %v669 = vmul.f32 %v668, 0.5
    %v670 = vsel %vm272, %v668, %v669
    %v671 = vtanh.pop %v670
    %v672 = vadd.f32 %v671, 1.0
    %v673 = vmul.f32 %v672, 0.5
    %v674 = vsel %vm272, %v671, %v673
    %v675 = vmul.f32 %v674, %v586
    %677 = vrot.lane.b32.xlu0 %v674, 64
    %v678 = vpop.permute.xlu0 %677
    %v680 = vmul.f32 %v674, %v678
    %682 = vrot.lane.b32.xlu0 %v680, 32
    %v683 = vpop.permute.xlu0 %682
    %v685 = vadd.f32 %v675, %v683
    %v686 = vtanh.pop %v685
    %688 = vrot.lane.b32.xlu0 %v686, 64
    %v689 = vpop.permute.xlu0 %688
    %v691 = vmul.f32 %v674, %v689
    %693 = vrot.lane.b32.xlu0 %v691, 32
    %v694 = vpop.permute.xlu0 %693
    %v695 = vsel %vm193, %v694, 0
    %697 = vmatprep.subr.mxu0 0.0
    %698 = vmatpush1.msra.mxu0 0.0
    %699 = vmatprep.subr.mxu0 0.0
    %700 = vmatpush1.msra.mxu0 0.0
    %701 = vmatprep.subr.mxu0 0.0
    %702 = vmatpush1.msra.mxu0 0.0
    %703 = vmatprep.subr.mxu0 0.0
    %704 = vmatpush1.msra.mxu0 0.0
    %705 = vmatprep.subr.mxu0 0.0
    %706 = vmatpush1.msra.mxu0 0.0
    %707 = vmatprep.subr.mxu0 0.0
    %708 = vmatpush1.msra.mxu0 0.0
    %709 = vmatprep.subr.mxu0 0.0
    %710 = vmatpush1.msra.mxu0 0.0
    %711 = vmatprep.subr.mxu0 0.0
    %712 = vmatpush1.msra.mxu0 0.0
    %713 = vmatprep.subr.mxu0 0.0
    %714 = vmatpush1.msra.mxu0 0.0
    %715 = vmatprep.subr.mxu0 0.0
    %716 = vmatpush1.msra.mxu0 0.0
    %717 = vmatprep.subr.mxu0 0.0
    %718 = vmatpush1.msra.mxu0 0.0
    %719 = vmatprep.subr.mxu0 0.0
    %720 = vmatpush1.msra.mxu0 0.0
    %721 = vmatprep.subr.mxu0 0.0
    %722 = vmatpush1.msra.mxu0 %v192
    %723 = vmatprep.subr.mxu0 0.0
    %724 = vmatpush1.msra.mxu0 %v191
    %725 = vmatprep.subr.mxu0 0.0
    %726 = vmatpush1.msra.mxu0 %v190
    %727 = vmatprep.subr.mxu0 0.0
    %728 = vmatpush1.msra.mxu0 %v189
    %729 = vmatprep.subr.mxu0 0.0
    %730 = vmatpush2.msra.mxu0 0.0
    %731 = vmatprep.subr.mxu0 0.0
    %732 = vmatpush2.msra.mxu0 0.0
    %733 = vmatprep.subr.mxu0 0.0
    %734 = vmatpush2.msra.mxu0 0.0
    %735 = vmatprep.subr.mxu0 0.0
    %736 = vmatpush2.msra.mxu0 0.0
    %737 = vmatprep.subr.mxu0 0.0
    %738 = vmatpush2.msra.mxu0 0.0
    %739 = vmatprep.subr.mxu0 0.0
    %740 = vmatpush2.msra.mxu0 0.0
    %741 = vmatprep.subr.mxu0 0.0
    %742 = vmatpush2.msra.mxu0 0.0
    %743 = vmatprep.subr.mxu0 0.0
    %744 = vmatpush2.msra.mxu0 0.0
    %745 = vmatprep.subr.mxu0 0.0
    %746 = vmatpush2.msra.mxu0 0.0
    %747 = vmatprep.subr.mxu0 0.0
    %748 = vmatpush2.msra.mxu0 0.0
    %749 = vmatprep.subr.mxu0 0.0
    %750 = vmatpush2.msra.mxu0 0.0
    %751 = vmatprep.subr.mxu0 0.0
    %752 = vmatpush2.msra.mxu0 0.0
    %753 = vmatprep.subr.mxu0 0.0
    %754 = vmatpush2.msra.mxu0 0.0
    %755 = vmatprep.subr.mxu0 0.0
    %756 = vmatpush2.msra.mxu0 0.0
    %757 = vmatprep.subr.mxu0 0.0
    %758 = vmatpush2.msra.mxu0 0.0
    %759 = vmatprep.subr.mxu0 0.0
    %760 = vmatpush2.msra.mxu0 0.0
    %761 = vmatprep.mubr.f32.mxu0 0.0
    %762 = vmatmul.mubr.f32.gmra.mxu0 %v695
    %v763 = vpop.f32.mrf.mxu0
    %v764 = vadd.f32 0.0, %v763
    %v765 = vpop.f32.mrf.mxu0
    %766 = vdwg.mxu0
    %v767 = vadd.f32 %v176, %v764
    %v768 = vmul.f32 %v767, 0.5
    %v769 = vsel %vm272, %v767, %v768
    %v770 = vtanh.pop %v769
    %v771 = vadd.f32 %v770, 1.0
    %v772 = vmul.f32 %v771, 0.5
    %v773 = vsel %vm272, %v770, %v772
    %v774 = vmul.f32 %v773, %v685
    %776 = vrot.lane.b32.xlu0 %v773, 64
    %v777 = vpop.permute.xlu0 %776
    %v779 = vmul.f32 %v773, %v777
    %781 = vrot.lane.b32.xlu0 %v779, 32
    %v782 = vpop.permute.xlu0 %781
    %v784 = vadd.f32 %v774, %v782
    %v785 = vtanh.pop %v784
    %787 = vrot.lane.b32.xlu0 %v785, 64
    %v788 = vpop.permute.xlu0 %787
    %v790 = vmul.f32 %v773, %v788
    %792 = vrot.lane.b32.xlu0 %v790, 32
    %v793 = vpop.permute.xlu0 %792
    %v794 = vsel %vm193, %v793, 0
    %796 = vmatprep.subr.mxu0 0.0
    %797 = vmatpush1.msra.mxu0 0.0
    %798 = vmatprep.subr.mxu0 0.0
    %799 = vmatpush1.msra.mxu0 0.0
    %800 = vmatprep.subr.mxu0 0.0
    %801 = vmatpush1.msra.mxu0 0.0
    %802 = vmatprep.subr.mxu0 0.0
    %803 = vmatpush1.msra.mxu0 0.0
    %804 = vmatprep.subr.mxu0 0.0
    %805 = vmatpush1.msra.mxu0 0.0
    %806 = vmatprep.subr.mxu0 0.0
    %807 = vmatpush1.msra.mxu0 0.0
    %808 = vmatprep.subr.mxu0 0.0
    %809 = vmatpush1.msra.mxu0 0.0
    %810 = vmatprep.subr.mxu0 0.0
    %811 = vmatpush1.msra.mxu0 0.0
    %812 = vmatprep.subr.mxu0 0.0
    %813 = vmatpush1.msra.mxu0 0.0
    %814 = vmatprep.subr.mxu0 0.0
    %815 = vmatpush1.msra.mxu0 0.0
    %816 = vmatprep.subr.mxu0 0.0
    %817 = vmatpush1.msra.mxu0 0.0
    %818 = vmatprep.subr.mxu0 0.0
    %819 = vmatpush1.msra.mxu0 0.0
    %820 = vmatprep.subr.mxu0 0.0
    %821 = vmatpush1.msra.mxu0 %v192
    %822 = vmatprep.subr.mxu0 0.0
    %823 = vmatpush1.msra.mxu0 %v191
    %824 = vmatprep.subr.mxu0 0.0
    %825 = vmatpush1.msra.mxu0 %v190
    %826 = vmatprep.subr.mxu0 0.0
    %827 = vmatpush1.msra.mxu0 %v189
    %828 = vmatprep.subr.mxu0 0.0
    %829 = vmatpush2.msra.mxu0 0.0
    %830 = vmatprep.subr.mxu0 0.0
    %831 = vmatpush2.msra.mxu0 0.0
    %832 = vmatprep.subr.mxu0 0.0
    %833 = vmatpush2.msra.mxu0 0.0
    %834 = vmatprep.subr.mxu0 0.0
    %835 = vmatpush2.msra.mxu0 0.0
    %836 = vmatprep.subr.mxu0 0.0
    %837 = vmatpush2.msra.mxu0 0.0
    %838 = vmatprep.subr.mxu0 0.0
    %839 = vmatpush2.msra.mxu0 0.0
    %840 = vmatprep.subr.mxu0 0.0
    %841 = vmatpush2.msra.mxu0 0.0
    %842 = vmatprep.subr.mxu0 0.0
    %843 = vmatpush2.msra.mxu0 0.0
    %844 = vmatprep.subr.mxu0 0.0
    %845 = vmatpush2.msra.mxu0 0.0
    %846 = vmatprep.subr.mxu0 0.0
    %847 = vmatpush2.msra.mxu0 0.0
    %848 = vmatprep.subr.mxu0 0.0
    %849 = vmatpush2.msra.mxu0 0.0
    %850 = vmatprep.subr.mxu0 0.0
    %851 = vmatpush2.msra.mxu0 0.0
    %852 = vmatprep.subr.mxu0 0.0
    %853 = vmatpush2.msra.mxu0 0.0
    %854 = vmatprep.subr.mxu0 0.0
    %855 = vmatpush2.msra.mxu0 0.0
    %856 = vmatprep.subr.mxu0 0.0
    %857 = vmatpush2.msra.mxu0 0.0
    %858 = vmatprep.subr.mxu0 0.0
    %859 = vmatpush2.msra.mxu0 0.0
    %860 = vmatprep.mubr.f32.mxu0 0.0
    %861 = vmatmul.mubr.f32.gmra.mxu0 %v794
    %v862 = vpop.f32.mrf.mxu0
    %v863 = vadd.f32 0.0, %v862
    %v864 = vpop.f32.mrf.mxu0
    %865 = vdwg.mxu0
    %v866 = vadd.f32 %v181, %v863
    %v867 = vmul.f32 %v866, 0.5
    %v868 = vsel %vm272, %v866, %v867
    %v869 = vtanh.pop %v868
    %v870 = vadd.f32 %v869, 1.0
    %v871 = vmul.f32 %v870, 0.5
    %v872 = vsel %vm272, %v869, %v871
    %v873 = vmul.f32 %v872, %v784
    %875 = vrot.lane.b32.xlu0 %v872, 64
    %v876 = vpop.permute.xlu0 %875
    %v878 = vmul.f32 %v872, %v876
    %880 = vrot.lane.b32.xlu0 %v878, 32
    %v881 = vpop.permute.xlu0 %880
    %v883 = vadd.f32 %v873, %v881
    %v884 = vtanh.pop %v883
    %886 = vrot.lane.b32.xlu0 %v884, 64
    %v887 = vpop.permute.xlu0 %886
    %v889 = vmul.f32 %v872, %v887
    %891 = vrot.lane.b32.xlu0 %v889, 32
    %v892 = vpop.permute.xlu0 %891
    %v893 = vsel %vm193, %v892, 0
    %895 = vmatprep.subr.mxu0 0.0
    %896 = vmatpush1.msra.mxu0 0.0
    %897 = vmatprep.subr.mxu0 0.0
    %898 = vmatpush1.msra.mxu0 0.0
    %899 = vmatprep.subr.mxu0 0.0
    %900 = vmatpush1.msra.mxu0 0.0
    %901 = vmatprep.subr.mxu0 0.0
    %902 = vmatpush1.msra.mxu0 0.0
    %903 = vmatprep.subr.mxu0 0.0
    %904 = vmatpush1.msra.mxu0 0.0
    %905 = vmatprep.subr.mxu0 0.0
    %906 = vmatpush1.msra.mxu0 0.0
    %907 = vmatprep.subr.mxu0 0.0
    %908 = vmatpush1.msra.mxu0 0.0
    %909 = vmatprep.subr.mxu0 0.0
    %910 = vmatpush1.msra.mxu0 0.0
    %911 = vmatprep.subr.mxu0 0.0
    %912 = vmatpush1.msra.mxu0 0.0
    %913 = vmatprep.subr.mxu0 0.0
    %914 = vmatpush1.msra.mxu0 0.0
    %915 = vmatprep.subr.mxu0 0.0
    %916 = vmatpush1.msra.mxu0 0.0
    %917 = vmatprep.subr.mxu0 0.0
    %918 = vmatpush1.msra.mxu0 0.0
    %919 = vmatprep.subr.mxu0 0.0
    %920 = vmatpush1.msra.mxu0 %v192
    %921 = vmatprep.subr.mxu0 0.0
    %922 = vmatpush1.msra.mxu0 %v191
    %923 = vmatprep.subr.mxu0 0.0
    %924 = vmatpush1.msra.mxu0 %v190
    %925 = vmatprep.subr.mxu0 0.0
    %926 = vmatpush1.msra.mxu0 %v189
    %927 = vmatprep.subr.mxu0 0.0
    %928 = vmatpush2.msra.mxu0 0.0
    %929 = vmatprep.subr.mxu0 0.0
    %930 = vmatpush2.msra.mxu0 0.0
    %931 = vmatprep.subr.mxu0 0.0
    %932 = vmatpush2.msra.mxu0 0.0
    %933 = vmatprep.subr.mxu0 0.0
    %934 = vmatpush2.msra.mxu0 0.0
    %935 = vmatprep.subr.mxu0 0.0
    %936 = vmatpush2.msra.mxu0 0.0
    %937 = vmatprep.subr.mxu0 0.0
    %938 = vmatpush2.msra.mxu0 0.0
    %939 = vmatprep.subr.mxu0 0.0
    %940 = vmatpush2.msra.mxu0 0.0
    %941 = vmatprep.subr.mxu0 0.0
    %942 = vmatpush2.msra.mxu0 0.0
    %943 = vmatprep.subr.mxu0 0.0
    %944 = vmatpush2.msra.mxu0 0.0
    %945 = vmatprep.subr.mxu0 0.0
    %946 = vmatpush2.msra.mxu0 0.0
    %947 = vmatprep.subr.mxu0 0.0
    %948 = vmatpush2.msra.mxu0 0.0
    %949 = vmatprep.subr.mxu0 0.0
    %950 = vmatpush2.msra.mxu0 0.0
    %951 = vmatprep.subr.mxu0 0.0
    %952 = vmatpush2.msra.mxu0 0.0
    %953 = vmatprep.subr.mxu0 0.0
    %954 = vmatpush2.msra.mxu0 0.0
    %955 = vmatprep.subr.mxu0 0.0
    %956 = vmatpush2.msra.mxu0 0.0
    %957 = vmatprep.subr.mxu0 0.0
    %958 = vmatpush2.msra.mxu0 0.0
    %959 = vmatprep.mubr.f32.mxu0 0.0
    %960 = vmatmul.mubr.f32.gmra.mxu0 %v893
    %v961 = vpop.f32.mrf.mxu0
    %v962 = vadd.f32 0.0, %v961
    %v963 = vpop.f32.mrf.mxu0
    %964 = vdwg.mxu0
    %v965 = vadd.f32 %v186, %v962
    %v966 = vmul.f32 %v965, 0.5
    %v967 = vsel %vm272, %v965, %v966
    %v968 = vtanh.pop %v967
    %v969 = vadd.f32 %v968, 1.0
    %v970 = vmul.f32 %v969, 0.5
    %v971 = vsel %vm272, %v968, %v970
    %v972 = vmul.f32 %v971, %v883
    %974 = vrot.lane.b32.xlu0 %v971, 64
    %v975 = vpop.permute.xlu0 %974
    %v977 = vmul.f32 %v971, %v975
    %979 = vrot.lane.b32.xlu0 %v977, 32
    %v980 = vpop.permute.xlu0 %979
    %v982 = vadd.f32 %v972, %v980
    %v983 = vtanh.pop %v982
    %985 = vrot.lane.b32.xlu0 %v983, 64
    %v986 = vpop.permute.xlu0 %985
    %v988 = vmul.f32 %v971, %v986
    %v989 = vld [vmem:[%s6] sm:$0x3]
    %v990 = vld [vmem:[%s8] sm:$0xff]
    %v991 = vld [vmem:[%s8 + $0x8] sm:$0xff]
    %v992 = vld [vmem:[%s8 + $0x10] sm:$0xff]
    %v993 = vld [vmem:[%s8 + $0x18] sm:$0xff]
    %v994 = vld [vmem:[%s7] sm:$0x1]
    %v995 = vld [vmem:[%s9] sm:$0xff]
    %v996 = vld [vmem:[%s9 + $0x8] sm:$0xff]
    %v997 = vld [vmem:[%s9 + $0x10] sm:$0xff]
    %v998 = vld [vmem:[%s9 + $0x18] sm:$0xff]
    %v999 = vld [vmem:[%s10] sm:$0x1]
    %v1000 = vld [vmem:[%s1] sm:$0xff]
    %1002 = vrot.lane.b32.xlu0 %v988, 32
    %v1003 = vpop.permute.xlu0 %1002
    %v1004 = vsel %vm193, %v1003, 0
    %1006 = vmatprep.subr.mxu0 0.0
    %1007 = vmatpush1.msra.mxu0 0.0
    %1008 = vmatprep.subr.mxu0 0.0
    %1009 = vmatpush1.msra.mxu0 0.0
    %1010 = vmatprep.subr.mxu0 0.0
    %1011 = vmatpush1.msra.mxu0 0.0
    %1012 = vmatprep.subr.mxu0 0.0
    %1013 = vmatpush1.msra.mxu0 0.0
    %1014 = vmatprep.subr.mxu0 0.0
    %1015 = vmatpush1.msra.mxu0 0.0
    %1016 = vmatprep.subr.mxu0 0.0
    %1017 = vmatpush1.msra.mxu0 0.0
    %1018 = vmatprep.subr.mxu0 0.0
    %1019 = vmatpush1.msra.mxu0 0.0
    %1020 = vmatprep.subr.mxu0 0.0
    %1021 = vmatpush1.msra.mxu0 0.0
    %1022 = vmatprep.subr.mxu0 0.0
    %1023 = vmatpush1.msra.mxu0 0.0
    %1024 = vmatprep.subr.mxu0 0.0
    %1025 = vmatpush1.msra.mxu0 0.0
    %1026 = vmatprep.subr.mxu0 0.0
    %1027 = vmatpush1.msra.mxu0 0.0
    %1028 = vmatprep.subr.mxu0 0.0
    %1029 = vmatpush1.msra.mxu0 0.0
    %1030 = vmatprep.subr.mxu0 0.0
    %1031 = vmatpush1.msra.mxu0 %v993
    %1032 = vmatprep.subr.mxu0 0.0
    %1033 = vmatpush1.msra.mxu0 %v992
    %1034 = vmatprep.subr.mxu0 0.0
    %1035 = vmatpush1.msra.mxu0 %v991
    %1036 = vmatprep.subr.mxu0 0.0
    %1037 = vmatpush1.msra.mxu0 %v990
    %1038 = vmatprep.subr.mxu0 0.0
    %1039 = vmatpush2.msra.mxu0 0.0
    %1040 = vmatprep.subr.mxu0 0.0
    %1041 = vmatpush2.msra.mxu0 0.0
    %1042 = vmatprep.subr.mxu0 0.0
    %1043 = vmatpush2.msra.mxu0 0.0
    %1044 = vmatprep.subr.mxu0 0.0
    %1045 = vmatpush2.msra.mxu0 0.0
    %1046 = vmatprep.subr.mxu0 0.0
    %1047 = vmatpush2.msra.mxu0 0.0
    %1048 = vmatprep.subr.mxu0 0.0
    %1049 = vmatpush2.msra.mxu0 0.0
    %1050 = vmatprep.subr.mxu0 0.0
    %1051 = vmatpush2.msra.mxu0 0.0
    %1052 = vmatprep.subr.mxu0 0.0
    %1053 = vmatpush2.msra.mxu0 0.0
    %1054 = vmatprep.subr.mxu0 0.0
    %1055 = vmatpush2.msra.mxu0 0.0
    %1056 = vmatprep.subr.mxu0 0.0
    %1057 = vmatpush2.msra.mxu0 0.0
    %1058 = vmatprep.subr.mxu0 0.0
    %1059 = vmatpush2.msra.mxu0 0.0
    %1060 = vmatprep.subr.mxu0 0.0
    %1061 = vmatpush2.msra.mxu0 0.0
    %1062 = vmatprep.subr.mxu0 0.0
    %1063 = vmatpush2.msra.mxu0 0.0
    %1064 = vmatprep.subr.mxu0 0.0
    %1065 = vmatpush2.msra.mxu0 0.0
    %1066 = vmatprep.subr.mxu0 0.0
    %1067 = vmatpush2.msra.mxu0 0.0
    %1068 = vmatprep.subr.mxu0 0.0
    %1069 = vmatpush2.msra.mxu0 0.0
    %1070 = vmatprep.mubr.f32.mxu0 0.0
    %1071 = vmatmul.mubr.f32.gmra.mxu0 %v1004
    %v1072 = vpop.f32.mrf.mxu0
    %v1073 = vadd.f32 0.0, %v1072
    %v1074 = vpop.f32.mrf.mxu0
    %1075 = vdwg.mxu0
    %v1077 = vsel %vm55, %v1000, 0
    %v1080 = vsel %vm80, %v989, 0
    %1082 = vmatprep.subr.mxu0 0.0
    %1083 = vmatpush1.msra.mxu0 0.0
    %1084 = vmatprep.subr.mxu0 0.0
    %1085 = vmatpush1.msra.mxu0 0.0
    %1086 = vmatprep.subr.mxu0 0.0
    %1087 = vmatpush1.msra.mxu0 0.0
    %1088 = vmatprep.subr.mxu0 0.0
    %1089 = vmatpush1.msra.mxu0 0.0
    %1090 = vmatprep.subr.mxu0 0.0
    %1091 = vmatpush1.msra.mxu0 0.0
    %1092 = vmatprep.subr.mxu0 0.0
    %1093 = vmatpush1.msra.mxu0 0.0
    %1094 = vmatprep.subr.mxu0 0.0
    %1095 = vmatpush1.msra.mxu0 0.0
    %1096 = vmatprep.subr.mxu0 0.0
    %1097 = vmatpush1.msra.mxu0 0.0
    %1098 = vmatprep.subr.mxu0 0.0
    %1099 = vmatpush1.msra.mxu0 0.0
    %1100 = vmatprep.subr.mxu0 0.0
    %1101 = vmatpush1.msra.mxu0 0.0
    %1102 = vmatprep.subr.mxu0 0.0
    %1103 = vmatpush1.msra.mxu0 0.0
    %1104 = vmatprep.subr.mxu0 0.0
    %1105 = vmatpush1.msra.mxu0 0.0
    %1106 = vmatprep.subr.mxu0 0.0
    %1107 = vmatpush1.msra.mxu0 0.0
    %1108 = vmatprep.subr.mxu0 0.0
    %1109 = vmatpush1.msra.mxu0 0.0
    %1110 = vmatprep.subr.mxu0 0.0
    %1111 = vmatpush1.msra.mxu0 0.0
    %1112 = vmatprep.subr.mxu0 0.0
    %1113 = vmatpush1.msra.mxu0 %v1080
    %1114 = vmatprep.subr.mxu0 0.0
    %1115 = vmatpush2.msra.mxu0 0.0
    %1116 = vmatprep.subr.mxu0 0.0
    %1117 = vmatpush2.msra.mxu0 0.0
    %1118 = vmatprep.subr.mxu0 0.0
    %1119 = vmatpush2.msra.mxu0 0.0
    %1120 = vmatprep.subr.mxu0 0.0
    %1121 = vmatpush2.msra.mxu0 0.0
    %1122 = vmatprep.subr.mxu0 0.0
    %1123 = vmatpush2.msra.mxu0 0.0
    %1124 = vmatprep.subr.mxu0 0.0
    %1125 = vmatpush2.msra.mxu0 0.0
    %1126 = vmatprep.subr.mxu0 0.0
    %1127 = vmatpush2.msra.mxu0 0.0
    %1128 = vmatprep.subr.mxu0 0.0
    %1129 = vmatpush2.msra.mxu0 0.0
    %1130 = vmatprep.subr.mxu0 0.0
    %1131 = vmatpush2.msra.mxu0 0.0
    %1132 = vmatprep.subr.mxu0 0.0
    %1133 = vmatpush2.msra.mxu0 0.0
    %1134 = vmatprep.subr.mxu0 0.0
    %1135 = vmatpush2.msra.mxu0 0.0
    %1136 = vmatprep.subr.mxu0 0.0
    %1137 = vmatpush2.msra.mxu0 0.0
    %1138 = vmatprep.subr.mxu0 0.0
    %1139 = vmatpush2.msra.mxu0 0.0
    %1140 = vmatprep.subr.mxu0 0.0
    %1141 = vmatpush2.msra.mxu0 0.0
    %1142 = vmatprep.subr.mxu0 0.0
    %1143 = vmatpush2.msra.mxu0 0.0
    %1144 = vmatprep.subr.mxu0 0.0
    %1145 = vmatpush2.msra.mxu0 0.0
    %1146 = vmatprep.mubr.f32.mxu0 0.0
    %1147 = vmatmul.mubr.f32.gmra.mxu0 %v1077
    %v1148 = vpop.f32.mrf.mxu0
    %v1149 = vadd.f32 %v1073, %v1148
    %v1150 = vpop.f32.mrf.mxu0
    %1151 = vdwg.mxu0
    %v1153 = vlaneseq
    %v1154 = vshrl.u32 %v1153, 7
    %v1155 = vsub.s32 0, %v1154
    %v1156 = vrot.slane %v994, %v1155
    %v1158 = vadd.f32 %v1149, %v1156
    %v1159 = vmul.f32 %v1158, 0.5
    %v1160 = vsel %vm272, %v1158, %v1159
    %v1161 = vtanh.pop %v1160
    %v1162 = vadd.f32 %v1161, 1.0
    %v1163 = vmul.f32 %v1162, 0.5
    %v1164 = vsel %vm272, %v1161, %v1163
    %v1165 = vmul.f32 %v1164, %v982
    %1167 = vrot.lane.b32.xlu0 %v1164, 64
    %v1168 = vpop.permute.xlu0 %1167
    %v1170 = vmul.f32 %v1164, %v1168
    %1172 = vrot.lane.b32.xlu0 %v1170, 32
    %v1173 = vpop.permute.xlu0 %1172
    %v1175 = vadd.f32 %v1165, %v1173
    %v1176 = vtanh.pop %v1175
    %1178 = vrot.lane.b32.xlu0 %v1176, 64
    %v1179 = vpop.permute.xlu0 %1178
    %v1181 = vmul.f32 %v1164, %v1179
    %v1183 = vlaneseq
    %v1184 = vshrl.u32 %v1183, 7
    %v1185 = vsub.s32 0, %v1184
    %v1186 = vrot.slane %v999, %v1185
    %1189 = vrot.lane.b32.xlu0 %v1181, 32
    %v1190 = vpop.permute.xlu0 %1189
    %v1191 = vsel %vm193, %v1190, 0
    %1193 = vmatprep.subr.mxu0 0.0
    %1194 = vmatpush1.msra.mxu0 0.0
    %1195 = vmatprep.subr.mxu0 0.0
    %1196 = vmatpush1.msra.mxu0 0.0
    %1197 = vmatprep.subr.mxu0 0.0
    %1198 = vmatpush1.msra.mxu0 0.0
    %1199 = vmatprep.subr.mxu0 0.0
    %1200 = vmatpush1.msra.mxu0 0.0
    %1201 = vmatprep.subr.mxu0 0.0
    %1202 = vmatpush1.msra.mxu0 0.0
    %1203 = vmatprep.subr.mxu0 0.0
    %1204 = vmatpush1.msra.mxu0 0.0
    %1205 = vmatprep.subr.mxu0 0.0
    %1206 = vmatpush1.msra.mxu0 0.0
    %1207 = vmatprep.subr.mxu0 0.0
    %1208 = vmatpush1.msra.mxu0 0.0
    %1209 = vmatprep.subr.mxu0 0.0
    %1210 = vmatpush1.msra.mxu0 0.0
    %1211 = vmatprep.subr.mxu0 0.0
    %1212 = vmatpush1.msra.mxu0 0.0
    %1213 = vmatprep.subr.mxu0 0.0
    %1214 = vmatpush1.msra.mxu0 0.0
    %1215 = vmatprep.subr.mxu0 0.0
    %1216 = vmatpush1.msra.mxu0 0.0
    %1217 = vmatprep.subr.mxu0 0.0
    %1218 = vmatpush1.msra.mxu0 %v998
    %1219 = vmatprep.subr.mxu0 0.0
    %1220 = vmatpush1.msra.mxu0 %v997
    %1221 = vmatprep.subr.mxu0 0.0
    %1222 = vmatpush1.msra.mxu0 %v996
    %1223 = vmatprep.subr.mxu0 0.0
    %1224 = vmatpush1.msra.mxu0 %v995
    %1225 = vmatprep.subr.mxu0 0.0
    %1226 = vmatpush2.msra.mxu0 0.0
    %1227 = vmatprep.subr.mxu0 0.0
    %1228 = vmatpush2.msra.mxu0 0.0
    %1229 = vmatprep.subr.mxu0 0.0
    %1230 = vmatpush2.msra.mxu0 0.0
    %1231 = vmatprep.subr.mxu0 0.0
    %1232 = vmatpush2.msra.mxu0 0.0
    %1233 = vmatprep.subr.mxu0 0.0
    %1234 = vmatpush2.msra.mxu0 0.0
    %1235 = vmatprep.subr.mxu0 0.0
    %1236 = vmatpush2.msra.mxu0 0.0
    %1237 = vmatprep.subr.mxu0 0.0
    %1238 = vmatpush2.msra.mxu0 0.0
    %1239 = vmatprep.subr.mxu0 0.0
    %1240 = vmatpush2.msra.mxu0 0.0
    %1241 = vmatprep.subr.mxu0 0.0
    %1242 = vmatpush2.msra.mxu0 0.0
    %1243 = vmatprep.subr.mxu0 0.0
    %1244 = vmatpush2.msra.mxu0 0.0
    %1245 = vmatprep.subr.mxu0 0.0
    %1246 = vmatpush2.msra.mxu0 0.0
    %1247 = vmatprep.subr.mxu0 0.0
    %1248 = vmatpush2.msra.mxu0 0.0
    %1249 = vmatprep.subr.mxu0 0.0
    %1250 = vmatpush2.msra.mxu0 0.0
    %1251 = vmatprep.subr.mxu0 0.0
    %1252 = vmatpush2.msra.mxu0 0.0
    %1253 = vmatprep.subr.mxu0 0.0
    %1254 = vmatpush2.msra.mxu0 0.0
    %1255 = vmatprep.subr.mxu0 0.0
    %1256 = vmatpush2.msra.mxu0 0.0
    %1257 = vmatprep.mubr.f32.mxu0 0.0
    %1258 = vmatmul.mubr.f32.gmra.mxu0 %v1191
    %v1259 = vpop.f32.mrf.mxu0
    %v1260 = vadd.f32 %v1186, %v1259
    %v1261 = vpop.f32.mrf.mxu0
    %1262 = vdwg.mxu0
    %v1263 = vadd.f32 %v1260, %v1000
    %v1264 = vmul.f32 %v1260, 1.442695
    %v1265 = vpow.pop %v1264
    %v1266 = vadd.f32 %v1265, 0.01
    %1268 = vrot.lane.b32.xlu0 %v1266, 127
    %v1269 = vpop.permute.xlu0 %1268
    %v1271 = vmul.f32 %v1266, %v1269
    %v1272 = vrsqrt.pop %v1271
    %v1273 = vmul.f32 %v1271, %v1272
    %vm1274 = vcmp.eq.f32.partialorder %v1271, inf
    %v1275 = vsel %vm1274, %v1271, %v1273
    %vm1276 = vcmp.eq.f32.partialorder %v1271, 0.0
    %v1277 = vand.u32 %v1271, 2147483648
    %v1278 = vsel %vm1276, %v1277, %v1275
    %v1279 = vtanh.pop %v1260
    %1281 = vrot.lane.b32.xlu0 %v1279, 126
    %v1282 = vpop.permute.xlu0 %1281
    %v1284 = vmul.f32 %v1278, %v1282
    %1286 = vrot.lane.b32.xlu0 %v1284, 2
    %v1287 = vpop.permute.xlu0 %1286
    %v1289 = vsel %vm55, %v1263, %v1266
    %vm1290 = vcmask 31744
    %v1291 = vsel %vm1290, %v1289, %v1287
    %v1292 = vadd.f32 %v1291, 0.0
    %v1293 = vld [vmem:[%s2] sm:$0xff]
    %v1294 = vsub.f32 %v1293, %v1292
    %v1295 = vmul.f32 %v1292, 0.16
    %1297 = vrot.lane.b32.xlu0 %v1295, 127
    %v1298 = vpop.permute.xlu0 %1297
    %v1300 = vmul.f32 %v1295, %v1298
    %v1301 = vmul.f32 %v1295, %v1295
    %1303 = vrot.lane.b32.xlu0 %v1301, 126
    %v1304 = vpop.permute.xlu0 %1303
    %v1306 = vsub.f32 %v1300, %v1304
    %v1307 = vrcp.pop %v1306
    %v1308 = vmul.f32 %v1294, %v1294
    %1309 = vrot.lane.b32.xlu0 %v1295, 125
    %v1310 = vpop.permute.xlu0 %1309
    %v1312 = vmul.f32 %v1308, %v1310
    %v1313 = vmul.f32 %v1308, %v1298
    %1315 = vrot.lane.b32.xlu0 %v1313, 127
    %v1316 = vpop.permute.xlu0 %1315
    %v1318 = vadd.f32 %v1312, %v1316
    %v1319 = vmul.f32 %v1295, 2.0
    %1321 = vrot.lane.b32.xlu0 %v1294, 4
    %v1322 = vpop.permute.xlu0 %1321
    %v1324 = vmul.f32 %v1319, %v1322
    %1325 = vrot.lane.b32.xlu0 %v1294, 3
    %v1326 = vpop.permute.xlu0 %1325
    %v1328 = vmul.f32 %v1324, %v1326
    %1330 = vrot.lane.b32.xlu0 %v1328, 124
    %v1331 = vpop.permute.xlu0 %1330
    %v1333 = vsub.f32 %v1318, %v1331
    %1335 = vrot.lane.b32.xlu0 %v1307, 126
    %v1336 = vpop.permute.xlu0 %1335
    %v1338 = vmul.f32 %v1333, %v1336
    %v1339 = vlog2.pop %v1306
    %v1340 = vmul.f32 %v1339, 0.6931472
    %1342 = vrot.lane.b32.xlu0 %v1340, 126
    %v1343 = vpop.permute.xlu0 %1342
    %v1345 = vadd.f32 %v1338, %v1343
    %v1346 = vmul.f32 %v1345, 0.5
    %v1347 = vadd.f32 %v1346, 0.0
    %1348 = vmatprep.subr.mxu0 0.0
    %1349 = vmatpush1.msra.mxu0 0.0
    %1350 = vmatprep.subr.mxu0 0.0
    %1351 = vmatpush1.msra.mxu0 0.0
    %1352 = vmatprep.subr.mxu0 0.0
    %1353 = vmatpush1.msra.mxu0 0.0
    %1354 = vmatprep.subr.mxu0 0.0
    %1355 = vmatpush1.msra.mxu0 0.0
    %1356 = vmatprep.subr.mxu0 0.0
    %1357 = vmatpush1.msra.mxu0 0.0
    %1358 = vmatprep.subr.mxu0 0.0
    %1359 = vmatpush1.msra.mxu0 0.0
    %1360 = vmatprep.subr.mxu0 0.0
    %1361 = vmatpush1.msra.mxu0 0.0
    %1362 = vmatprep.subr.mxu0 0.0
    %1363 = vmatpush1.msra.mxu0 0.0
    %1364 = vmatprep.subr.mxu0 0.0
    %1365 = vmatpush1.msra.mxu0 0.0
    %1366 = vmatprep.subr.mxu0 0.0
    %1367 = vmatpush1.msra.mxu0 0.0
    %1368 = vmatprep.subr.mxu0 0.0
    %1369 = vmatpush1.msra.mxu0 0.0
    %1370 = vmatprep.subr.mxu0 0.0
    %1371 = vmatpush1.msra.mxu0 0.0
    %1372 = vmatprep.subr.mxu0 0.0
    %1373 = vmatpush1.msra.mxu0 %v993
    %1374 = vmatprep.subr.mxu0 0.0
    %1375 = vmatpush1.msra.mxu0 %v992
    %1376 = vmatprep.subr.mxu0 0.0
    %1377 = vmatpush1.msra.mxu0 %v991
    %1378 = vmatprep.subr.mxu0 0.0
    %1379 = vmatpush1.msra.mxu0 %v990
    %1380 = vmatprep.subr.mxu0 0.0
    %1381 = vmatpush2.msra.mxu0 0.0
    %1382 = vmatprep.subr.mxu0 0.0
    %1383 = vmatpush2.msra.mxu0 0.0
    %1384 = vmatprep.subr.mxu0 0.0
    %1385 = vmatpush2.msra.mxu0 0.0
    %1386 = vmatprep.subr.mxu0 0.0
    %1387 = vmatpush2.msra.mxu0 0.0
    %1388 = vmatprep.subr.mxu0 0.0
    %1389 = vmatpush2.msra.mxu0 0.0
    %1390 = vmatprep.subr.mxu0 0.0
    %1391 = vmatpush2.msra.mxu0 0.0
    %1392 = vmatprep.subr.mxu0 0.0
    %1393 = vmatpush2.msra.mxu0 0.0
    %1394 = vmatprep.subr.mxu0 0.0
    %1395 = vmatpush2.msra.mxu0 0.0
    %1396 = vmatprep.subr.mxu0 0.0
    %1397 = vmatpush2.msra.mxu0 0.0
    %1398 = vmatprep.subr.mxu0 0.0
    %1399 = vmatpush2.msra.mxu0 0.0
    %1400 = vmatprep.subr.mxu0 0.0
    %1401 = vmatpush2.msra.mxu0 0.0
    %1402 = vmatprep.subr.mxu0 0.0
    %1403 = vmatpush2.msra.mxu0 0.0
    %1404 = vmatprep.subr.mxu0 0.0
    %1405 = vmatpush2.msra.mxu0 0.0
    %1406 = vmatprep.subr.mxu0 0.0
    %1407 = vmatpush2.msra.mxu0 0.0
    %1408 = vmatprep.subr.mxu0 0.0
    %1409 = vmatpush2.msra.mxu0 0.0
    %1410 = vmatprep.subr.mxu0 0.0
    %1411 = vmatpush2.msra.mxu0 0.0
    %1412 = vmatprep.mubr.f32.mxu0 0.0
    %1413 = vmatmul.mubr.f32.gmra.mxu0 %v1191
    %v1414 = vpop.f32.mrf.mxu0
    %v1415 = vadd.f32 0.0, %v1414
    %v1416 = vpop.f32.mrf.mxu0
    %1417 = vdwg.mxu0
    %v1419 = vsel %vm55, %v1263, 0
    %1421 = vmatprep.subr.mxu0 0.0
    %1422 = vmatpush1.msra.mxu0 0.0
    %1423 = vmatprep.subr.mxu0 0.0
    %1424 = vmatpush1.msra.mxu0 0.0
    %1425 = vmatprep.subr.mxu0 0.0
    %1426 = vmatpush1.msra.mxu0 0.0
    %1427 = vmatprep.subr.mxu0 0.0
    %1428 = vmatpush1.msra.mxu0 0.0
    %1429 = vmatprep.subr.mxu0 0.0
    %1430 = vmatpush1.msra.mxu0 0.0
    %1431 = vmatprep.subr.mxu0 0.0
    %1432 = vmatpush1.msra.mxu0 0.0
    %1433 = vmatprep.subr.mxu0 0.0
    %1434 = vmatpush1.msra.mxu0 0.0
    %1435 = vmatprep.subr.mxu0 0.0
    %1436 = vmatpush1.msra.mxu0 0.0
    %1437 = vmatprep.subr.mxu0 0.0
    %1438 = vmatpush1.msra.mxu0 0.0
    %1439 = vmatprep.subr.mxu0 0.0
    %1440 = vmatpush1.msra.mxu0 0.0
    %1441 = vmatprep.subr.mxu0 0.0
    %1442 = vmatpush1.msra.mxu0 0.0
    %1443 = vmatprep.subr.mxu0 0.0
    %1444 = vmatpush1.msra.mxu0 0.0
    %1445 = vmatprep.subr.mxu0 0.0
    %1446 = vmatpush1.msra.mxu0 0.0
    %1447 = vmatprep.subr.mxu0 0.0
    %1448 = vmatpush1.msra.mxu0 0.0
    %1449 = vmatprep.subr.mxu0 0.0
    %1450 = vmatpush1.msra.mxu0 0.0
    %1451 = vmatprep.subr.mxu0 0.0
    %1452 = vmatpush1.msra.mxu0 %v1080
    %1453 = vmatprep.subr.mxu0 0.0
    %1454 = vmatpush2.msra.mxu0 0.0
    %1455 = vmatprep.subr.mxu0 0.0
    %1456 = vmatpush2.msra.mxu0 0.0
    %1457 = vmatprep.subr.mxu0 0.0
    %1458 = vmatpush2.msra.mxu0 0.0
    %1459 = vmatprep.subr.mxu0 0.0
    %1460 = vmatpush2.msra.mxu0 0.0
    %1461 = vmatprep.subr.mxu0 0.0
    %1462 = vmatpush2.msra.mxu0 0.0
    %1463 = vmatprep.subr.mxu0 0.0
    %1464 = vmatpush2.msra.mxu0 0.0
    %1465 = vmatprep.subr.mxu0 0.0
    %1466 = vmatpush2.msra.mxu0 0.0
    %1467 = vmatprep.subr.mxu0 0.0
    %1468 = vmatpush2.msra.mxu0 0.0
    %1469 = vmatprep.subr.mxu0 0.0
    %1470 = vmatpush2.msra.mxu0 0.0
    %1471 = vmatprep.subr.mxu0 0.0
    %1472 = vmatpush2.msra.mxu0 0.0
    %1473 = vmatprep.subr.mxu0 0.0
    %1474 = vmatpush2.msra.mxu0 0.0
    %1475 = vmatprep.subr.mxu0 0.0
    %1476 = vmatpush2.msra.mxu0 0.0
    %1477 = vmatprep.subr.mxu0 0.0
    %1478 = vmatpush2.msra.mxu0 0.0
    %1479 = vmatprep.subr.mxu0 0.0
    %1480 = vmatpush2.msra.mxu0 0.0
    %1481 = vmatprep.subr.mxu0 0.0
    %1482 = vmatpush2.msra.mxu0 0.0
    %1483 = vmatprep.subr.mxu0 0.0
    %1484 = vmatpush2.msra.mxu0 0.0
    %1485 = vmatprep.mubr.f32.mxu0 0.0
    %1486 = vmatmul.mubr.f32.gmra.mxu0 %v1419
    %v1487 = vpop.f32.mrf.mxu0
    %v1488 = vadd.f32 %v1415, %v1487
    %v1489 = vpop.f32.mrf.mxu0
    %1490 = vdwg.mxu0
    %v1491 = vadd.f32 %v1488, %v1156
    %v1492 = vmul.f32 %v1491, 0.5
    %v1493 = vsel %vm272, %v1491, %v1492
    %v1494 = vtanh.pop %v1493
    %v1495 = vadd.f32 %v1494, 1.0
    %v1496 = vmul.f32 %v1495, 0.5
    %v1497 = vsel %vm272, %v1494, %v1496
    %v1498 = vmul.f32 %v1497, %v1175
    %1500 = vrot.lane.b32.xlu0 %v1497, 64
    %v1501 = vpop.permute.xlu0 %1500
    %v1503 = vmul.f32 %v1497, %v1501
    %1505 = vrot.lane.b32.xlu0 %v1503, 32
    %v1506 = vpop.permute.xlu0 %1505
    %v1508 = vadd.f32 %v1498, %v1506
    %v1509 = vtanh.pop %v1508
    %1511 = vrot.lane.b32.xlu0 %v1509, 64
    %v1512 = vpop.permute.xlu0 %1511
    %v1514 = vmul.f32 %v1497, %v1512
    %1516 = vrot.lane.b32.xlu0 %v1514, 32
    %v1517 = vpop.permute.xlu0 %1516
    %v1518 = vsel %vm193, %v1517, 0
    %1520 = vmatprep.subr.mxu0 0.0
    %1521 = vmatpush1.msra.mxu0 0.0
    %1522 = vmatprep.subr.mxu0 0.0
    %1523 = vmatpush1.msra.mxu0 0.0
    %1524 = vmatprep.subr.mxu0 0.0
    %1525 = vmatpush1.msra.mxu0 0.0
    %1526 = vmatprep.subr.mxu0 0.0
    %1527 = vmatpush1.msra.mxu0 0.0
    %1528 = vmatprep.subr.mxu0 0.0
    %1529 = vmatpush1.msra.mxu0 0.0
    %1530 = vmatprep.subr.mxu0 0.0
    %1531 = vmatpush1.msra.mxu0 0.0
    %1532 = vmatprep.subr.mxu0 0.0
    %1533 = vmatpush1.msra.mxu0 0.0
    %1534 = vmatprep.subr.mxu0 0.0
    %1535 = vmatpush1.msra.mxu0 0.0
    %1536 = vmatprep.subr.mxu0 0.0
    %1537 = vmatpush1.msra.mxu0 0.0
    %1538 = vmatprep.subr.mxu0 0.0
    %1539 = vmatpush1.msra.mxu0 0.0
    %1540 = vmatprep.subr.mxu0 0.0
    %1541 = vmatpush1.msra.mxu0 0.0
    %1542 = vmatprep.subr.mxu0 0.0
    %1543 = vmatpush1.msra.mxu0 0.0
    %1544 = vmatprep.subr.mxu0 0.0
    %1545 = vmatpush1.msra.mxu0 %v998
    %1546 = vmatprep.subr.mxu0 0.0
    %1547 = vmatpush1.msra.mxu0 %v997
    %1548 = vmatprep.subr.mxu0 0.0
    %1549 = vmatpush1.msra.mxu0 %v996
    %1550 = vmatprep.subr.mxu0 0.0
    %1551 = vmatpush1.msra.mxu0 %v995
    %1552 = vmatprep.subr.mxu0 0.0
    %1553 = vmatpush2.msra.mxu0 0.0
    %1554 = vmatprep.subr.mxu0 0.0
    %1555 = vmatpush2.msra.mxu0 0.0
    %1556 = vmatprep.subr.mxu0 0.0
    %1557 = vmatpush2.msra.mxu0 0.0
    %1558 = vmatprep.subr.mxu0 0.0
    %1559 = vmatpush2.msra.mxu0 0.0
    %1560 = vmatprep.subr.mxu0 0.0
    %1561 = vmatpush2.msra.mxu0 0.0
    %1562 = vmatprep.subr.mxu0 0.0
    %1563 = vmatpush2.msra.mxu0 0.0
    %1564 = vmatprep.subr.mxu0 0.0
    %1565 = vmatpush2.msra.mxu0 0.0
    %1566 = vmatprep.subr.mxu0 0.0
    %1567 = vmatpush2.msra.mxu0 0.0
    %1568 = vmatprep.subr.mxu0 0.0
    %1569 = vmatpush2.msra.mxu0 0.0
    %1570 = vmatprep.subr.mxu0 0.0
    %1571 = vmatpush2.msra.mxu0 0.0
    %1572 = vmatprep.subr.mxu0 0.0
    %1573 = vmatpush2.msra.mxu0 0.0
    %1574 = vmatprep.subr.mxu0 0.0
    %1575 = vmatpush2.msra.mxu0 0.0
    %1576 = vmatprep.subr.mxu0 0.0
    %1577 = vmatpush2.msra.mxu0 0.0
    %1578 = vmatprep.subr.mxu0 0.0
    %1579 = vmatpush2.msra.mxu0 0.0
    %1580 = vmatprep.subr.mxu0 0.0
    %1581 = vmatpush2.msra.mxu0 0.0
    %1582 = vmatprep.subr.mxu0 0.0
    %1583 = vmatpush2.msra.mxu0 0.0
    %1584 = vmatprep.mubr.f32.mxu0 0.0
    %1585 = vmatmul.mubr.f32.gmra.mxu0 %v1518
    %v1586 = vpop.f32.mrf.mxu0
    %v1587 = vadd.f32 %v1186, %v1586
    %v1588 = vpop.f32.mrf.mxu0
    %1589 = vdwg.mxu0
    %v1590 = vadd.f32 %v1587, %v1263
    %v1591 = vmul.f32 %v1587, 1.442695
    %v1592 = vpow.pop %v1591
    %v1593 = vadd.f32 %v1592, 0.01
    %1595 = vrot.lane.b32.xlu0 %v1593, 127
    %v1596 = vpop.permute.xlu0 %1595
    %v1598 = vmul.f32 %v1593, %v1596
    %v1599 = vrsqrt.pop %v1598
    %v1600 = vmul.f32 %v1598, %v1599
    %vm1601 = vcmp.eq.f32.partialorder %v1598, inf
    %v1602 = vsel %vm1601, %v1598, %v1600
    %vm1603 = vcmp.eq.f32.partialorder %v1598, 0.0
    %v1604 = vand.u32 %v1598, 2147483648
    %v1605 = vsel %vm1603, %v1604, %v1602
    %v1606 = vtanh.pop %v1587
    %1608 = vrot.lane.b32.xlu0 %v1606, 126
    %v1609 = vpop.permute.xlu0 %1608
    %v1611 = vmul.f32 %v1605, %v1609
    %1613 = vrot.lane.b32.xlu0 %v1611, 2
    %v1614 = vpop.permute.xlu0 %1613
    %v1616 = vsel %vm55, %v1590, %v1593
    %v1617 = vsel %vm1290, %v1616, %v1614
    %v1618 = vadd.f32 %v1292, %v1617
    %s1619 = scalar_lea.vmem %s2, 8
    %v1620 = vld [vmem:[%s1619] sm:$0xff]
    %v1621 = vsub.f32 %v1620, %v1618
    %v1622 = vmul.f32 %v1618, 0.16
    %1624 = vrot.lane.b32.xlu0 %v1622, 127
    %v1625 = vpop.permute.xlu0 %1624
    %v1627 = vmul.f32 %v1622, %v1625
    %v1628 = vmul.f32 %v1622, %v1622
    %1630 = vrot.lane.b32.xlu0 %v1628, 126
    %v1631 = vpop.permute.xlu0 %1630
    %v1633 = vsub.f32 %v1627, %v1631
    %v1634 = vrcp.pop %v1633
    %v1635 = vmul.f32 %v1621, %v1621
    %1636 = vrot.lane.b32.xlu0 %v1622, 125
    %v1637 = vpop.permute.xlu0 %1636
    %v1639 = vmul.f32 %v1635, %v1637
    %v1640 = vmul.f32 %v1635, %v1625
    %1642 = vrot.lane.b32.xlu0 %v1640, 127
    %v1643 = vpop.permute.xlu0 %1642
    %v1645 = vadd.f32 %v1639, %v1643
    %v1646 = vmul.f32 %v1622, 2.0
    %1648 = vrot.lane.b32.xlu0 %v1621, 4
    %v1649 = vpop.permute.xlu0 %1648
    %v1651 = vmul.f32 %v1646, %v1649
    %1652 = vrot.lane.b32.xlu0 %v1621, 3
    %v1653 = vpop.permute.xlu0 %1652
    %v1655 = vmul.f32 %v1651, %v1653
    %1657 = vrot.lane.b32.xlu0 %v1655, 124
    %v1658 = vpop.permute.xlu0 %1657
    %v1660 = vsub.f32 %v1645, %v1658
    %1662 = vrot.lane.b32.xlu0 %v1634, 126
    %v1663 = vpop.permute.xlu0 %1662
    %v1665 = vmul.f32 %v1660, %v1663
    %v1666 = vlog2.pop %v1633
    %v1667 = vmul.f32 %v1666, 0.6931472
    %1669 = vrot.lane.b32.xlu0 %v1667, 126
    %v1670 = vpop.permute.xlu0 %1669
    %v1672 = vadd.f32 %v1665, %v1670
    %v1673 = vmul.f32 %v1672, 0.5
    %v1674 = vadd.f32 %v1347, %v1673
    %1675 = vmatprep.subr.mxu0 0.0
    %1676 = vmatpush1.msra.mxu0 0.0
    %1677 = vmatprep.subr.mxu0 0.0
    %1678 = vmatpush1.msra.mxu0 0.0
    %1679 = vmatprep.subr.mxu0 0.0
    %1680 = vmatpush1.msra.mxu0 0.0
    %1681 = vmatprep.subr.mxu0 0.0
    %1682 = vmatpush1.msra.mxu0 0.0
    %1683 = vmatprep.subr.mxu0 0.0
    %1684 = vmatpush1.msra.mxu0 0.0
    %1685 = vmatprep.subr.mxu0 0.0
    %1686 = vmatpush1.msra.mxu0 0.0
    %1687 = vmatprep.subr.mxu0 0.0
    %1688 = vmatpush1.msra.mxu0 0.0
    %1689 = vmatprep.subr.mxu0 0.0
    %1690 = vmatpush1.msra.mxu0 0.0
    %1691 = vmatprep.subr.mxu0 0.0
    %1692 = vmatpush1.msra.mxu0 0.0
    %1693 = vmatprep.subr.mxu0 0.0
    %1694 = vmatpush1.msra.mxu0 0.0
    %1695 = vmatprep.subr.mxu0 0.0
    %1696 = vmatpush1.msra.mxu0 0.0
    %1697 = vmatprep.subr.mxu0 0.0
    %1698 = vmatpush1.msra.mxu0 0.0
    %1699 = vmatprep.subr.mxu0 0.0
    %1700 = vmatpush1.msra.mxu0 %v993
    %1701 = vmatprep.subr.mxu0 0.0
    %1702 = vmatpush1.msra.mxu0 %v992
    %1703 = vmatprep.subr.mxu0 0.0
    %1704 = vmatpush1.msra.mxu0 %v991
    %1705 = vmatprep.subr.mxu0 0.0
    %1706 = vmatpush1.msra.mxu0 %v990
    %1707 = vmatprep.subr.mxu0 0.0
    %1708 = vmatpush2.msra.mxu0 0.0
    %1709 = vmatprep.subr.mxu0 0.0
    %1710 = vmatpush2.msra.mxu0 0.0
    %1711 = vmatprep.subr.mxu0 0.0
    %1712 = vmatpush2.msra.mxu0 0.0
    %1713 = vmatprep.subr.mxu0 0.0
    %1714 = vmatpush2.msra.mxu0 0.0
    %1715 = vmatprep.subr.mxu0 0.0
    %1716 = vmatpush2.msra.mxu0 0.0
    %1717 = vmatprep.subr.mxu0 0.0
    %1718 = vmatpush2.msra.mxu0 0.0
    %1719 = vmatprep.subr.mxu0 0.0
    %1720 = vmatpush2.msra.mxu0 0.0
    %1721 = vmatprep.subr.mxu0 0.0
    %1722 = vmatpush2.msra.mxu0 0.0
    %1723 = vmatprep.subr.mxu0 0.0
    %1724 = vmatpush2.msra.mxu0 0.0
    %1725 = vmatprep.subr.mxu0 0.0
    %1726 = vmatpush2.msra.mxu0 0.0
    %1727 = vmatprep.subr.mxu0 0.0
    %1728 = vmatpush2.msra.mxu0 0.0
    %1729 = vmatprep.subr.mxu0 0.0
    %1730 = vmatpush2.msra.mxu0 0.0
    %1731 = vmatprep.subr.mxu0 0.0
    %1732 = vmatpush2.msra.mxu0 0.0
    %1733 = vmatprep.subr.mxu0 0.0
    %1734 = vmatpush2.msra.mxu0 0.0
    %1735 = vmatprep.subr.mxu0 0.0
    %1736 = vmatpush2.msra.mxu0 0.0
    %1737 = vmatprep.subr.mxu0 0.0
    %1738 = vmatpush2.msra.mxu0 0.0
    %1739 = vmatprep.mubr.f32.mxu0 0.0
    %1740 = vmatmul.mubr.f32.gmra.mxu0 %v1518
    %v1741 = vpop.f32.mrf.mxu0
    %v1742 = vadd.f32 0.0, %v1741
    %v1743 = vpop.f32.mrf.mxu0
    %1744 = vdwg.mxu0
    %v1746 = vsel %vm55, %v1590, 0
    %1748 = vmatprep.subr.mxu0 0.0
    %1749 = vmatpush1.msra.mxu0 0.0
    %1750 = vmatprep.subr.mxu0 0.0
    %1751 = vmatpush1.msra.mxu0 0.0
    %1752 = vmatprep.subr.mxu0 0.0
    %1753 = vmatpush1.msra.mxu0 0.0
    %1754 = vmatprep.subr.mxu0 0.0
    %1755 = vmatpush1.msra.mxu0 0.0
    %1756 = vmatprep.subr.mxu0 0.0
    %1757 = vmatpush1.msra.mxu0 0.0
    %1758 = vmatprep.subr.mxu0 0.0
    %1759 = vmatpush1.msra.mxu0 0.0
    %1760 = vmatprep.subr.mxu0 0.0
    %1761 = vmatpush1.msra.mxu0 0.0
    %1762 = vmatprep.subr.mxu0 0.0
    %1763 = vmatpush1.msra.mxu0 0.0
    %1764 = vmatprep.subr.mxu0 0.0
    %1765 = vmatpush1.msra.mxu0 0.0
    %1766 = vmatprep.subr.mxu0 0.0
    %1767 = vmatpush1.msra.mxu0 0.0
    %1768 = vmatprep.subr.mxu0 0.0
    %1769 = vmatpush1.msra.mxu0 0.0
    %1770 = vmatprep.subr.mxu0 0.0
    %1771 = vmatpush1.msra.mxu0 0.0
    %1772 = vmatprep.subr.mxu0 0.0
    %1773 = vmatpush1.msra.mxu0 0.0
    %1774 = vmatprep.subr.mxu0 0.0
    %1775 = vmatpush1.msra.mxu0 0.0
    %1776 = vmatprep.subr.mxu0 0.0
    %1777 = vmatpush1.msra.mxu0 0.0
    %1778 = vmatprep.subr.mxu0 0.0
    %1779 = vmatpush1.msra.mxu0 %v1080
    %1780 = vmatprep.subr.mxu0 0.0
    %1781 = vmatpush2.msra.mxu0 0.0
    %1782 = vmatprep.subr.mxu0 0.0
    %1783 = vmatpush2.msra.mxu0 0.0
    %1784 = vmatprep.subr.mxu0 0.0
    %1785 = vmatpush2.msra.mxu0 0.0
    %1786 = vmatprep.subr.mxu0 0.0
    %1787 = vmatpush2.msra.mxu0 0.0
    %1788 = vmatprep.subr.mxu0 0.0
    %1789 = vmatpush2.msra.mxu0 0.0
    %1790 = vmatprep.subr.mxu0 0.0
    %1791 = vmatpush2.msra.mxu0 0.0
    %1792 = vmatprep.subr.mxu0 0.0
    %1793 = vmatpush2.msra.mxu0 0.0
    %1794 = vmatprep.subr.mxu0 0.0
    %1795 = vmatpush2.msra.mxu0 0.0
    %1796 = vmatprep.subr.mxu0 0.0
    %1797 = vmatpush2.msra.mxu0 0.0
    %1798 = vmatprep.subr.mxu0 0.0
    %1799 = vmatpush2.msra.mxu0 0.0
    %1800 = vmatprep.subr.mxu0 0.0
    %1801 = vmatpush2.msra.mxu0 0.0
    %1802 = vmatprep.subr.mxu0 0.0
    %1803 = vmatpush2.msra.mxu0 0.0
    %1804 = vmatprep.subr.mxu0 0.0
    %1805 = vmatpush2.msra.mxu0 0.0
    %1806 = vmatprep.subr.mxu0 0.0
    %1807 = vmatpush2.msra.mxu0 0.0
    %1808 = vmatprep.subr.mxu0 0.0
    %1809 = vmatpush2.msra.mxu0 0.0
    %1810 = vmatprep.subr.mxu0 0.0
    %1811 = vmatpush2.msra.mxu0 0.0
    %1812 = vmatprep.mubr.f32.mxu0 0.0
    %1813 = vmatmul.mubr.f32.gmra.mxu0 %v1746
    %v1814 = vpop.f32.mrf.mxu0
    %v1815 = vadd.f32 %v1742, %v1814
    %v1816 = vpop.f32.mrf.mxu0
    %1817 = vdwg.mxu0
    %v1818 = vadd.f32 %v1815, %v1156
    %v1819 = vmul.f32 %v1818, 0.5
    %v1820 = vsel %vm272, %v1818, %v1819
    %v1821 = vtanh.pop %v1820
    %v1822 = vadd.f32 %v1821, 1.0
    %v1823 = vmul.f32 %v1822, 0.5
    %v1824 = vsel %vm272, %v1821, %v1823
    %v1825 = vmul.f32 %v1824, %v1508
    %1827 = vrot.lane.b32.xlu0 %v1824, 64
    %v1828 = vpop.permute.xlu0 %1827
    %v1830 = vmul.f32 %v1824, %v1828
    %1832 = vrot.lane.b32.xlu0 %v1830, 32
    %v1833 = vpop.permute.xlu0 %1832
    %v1835 = vadd.f32 %v1825, %v1833
    %v1836 = vtanh.pop %v1835
    %1838 = vrot.lane.b32.xlu0 %v1836, 64
    %v1839 = vpop.permute.xlu0 %1838
    %v1841 = vmul.f32 %v1824, %v1839
    %1843 = vrot.lane.b32.xlu0 %v1841, 32
    %v1844 = vpop.permute.xlu0 %1843
    %v1845 = vsel %vm193, %v1844, 0
    %1847 = vmatprep.subr.mxu0 0.0
    %1848 = vmatpush1.msra.mxu0 0.0
    %1849 = vmatprep.subr.mxu0 0.0
    %1850 = vmatpush1.msra.mxu0 0.0
    %1851 = vmatprep.subr.mxu0 0.0
    %1852 = vmatpush1.msra.mxu0 0.0
    %1853 = vmatprep.subr.mxu0 0.0
    %1854 = vmatpush1.msra.mxu0 0.0
    %1855 = vmatprep.subr.mxu0 0.0
    %1856 = vmatpush1.msra.mxu0 0.0
    %1857 = vmatprep.subr.mxu0 0.0
    %1858 = vmatpush1.msra.mxu0 0.0
    %1859 = vmatprep.subr.mxu0 0.0
    %1860 = vmatpush1.msra.mxu0 0.0
    %1861 = vmatprep.subr.mxu0 0.0
    %1862 = vmatpush1.msra.mxu0 0.0
    %1863 = vmatprep.subr.mxu0 0.0
    %1864 = vmatpush1.msra.mxu0 0.0
    %1865 = vmatprep.subr.mxu0 0.0
    %1866 = vmatpush1.msra.mxu0 0.0
    %1867 = vmatprep.subr.mxu0 0.0
    %1868 = vmatpush1.msra.mxu0 0.0
    %1869 = vmatprep.subr.mxu0 0.0
    %1870 = vmatpush1.msra.mxu0 0.0
    %1871 = vmatprep.subr.mxu0 0.0
    %1872 = vmatpush1.msra.mxu0 %v998
    %1873 = vmatprep.subr.mxu0 0.0
    %1874 = vmatpush1.msra.mxu0 %v997
    %1875 = vmatprep.subr.mxu0 0.0
    %1876 = vmatpush1.msra.mxu0 %v996
    %1877 = vmatprep.subr.mxu0 0.0
    %1878 = vmatpush1.msra.mxu0 %v995
    %1879 = vmatprep.subr.mxu0 0.0
    %1880 = vmatpush2.msra.mxu0 0.0
    %1881 = vmatprep.subr.mxu0 0.0
    %1882 = vmatpush2.msra.mxu0 0.0
    %1883 = vmatprep.subr.mxu0 0.0
    %1884 = vmatpush2.msra.mxu0 0.0
    %1885 = vmatprep.subr.mxu0 0.0
    %1886 = vmatpush2.msra.mxu0 0.0
    %1887 = vmatprep.subr.mxu0 0.0
    %1888 = vmatpush2.msra.mxu0 0.0
    %1889 = vmatprep.subr.mxu0 0.0
    %1890 = vmatpush2.msra.mxu0 0.0
    %1891 = vmatprep.subr.mxu0 0.0
    %1892 = vmatpush2.msra.mxu0 0.0
    %1893 = vmatprep.subr.mxu0 0.0
    %1894 = vmatpush2.msra.mxu0 0.0
    %1895 = vmatprep.subr.mxu0 0.0
    %1896 = vmatpush2.msra.mxu0 0.0
    %1897 = vmatprep.subr.mxu0 0.0
    %1898 = vmatpush2.msra.mxu0 0.0
    %1899 = vmatprep.subr.mxu0 0.0
    %1900 = vmatpush2.msra.mxu0 0.0
    %1901 = vmatprep.subr.mxu0 0.0
    %1902 = vmatpush2.msra.mxu0 0.0
    %1903 = vmatprep.subr.mxu0 0.0
    %1904 = vmatpush2.msra.mxu0 0.0
    %1905 = vmatprep.subr.mxu0 0.0
    %1906 = vmatpush2.msra.mxu0 0.0
    %1907 = vmatprep.subr.mxu0 0.0
    %1908 = vmatpush2.msra.mxu0 0.0
    %1909 = vmatprep.subr.mxu0 0.0
    %1910 = vmatpush2.msra.mxu0 0.0
    %1911 = vmatprep.mubr.f32.mxu0 0.0
    %1912 = vmatmul.mubr.f32.gmra.mxu0 %v1845
    %v1913 = vpop.f32.mrf.mxu0
    %v1914 = vadd.f32 %v1186, %v1913
    %v1915 = vpop.f32.mrf.mxu0
    %1916 = vdwg.mxu0
    %v1917 = vadd.f32 %v1914, %v1590
    %v1918 = vmul.f32 %v1914, 1.442695
    %v1919 = vpow.pop %v1918
    %v1920 = vadd.f32 %v1919, 0.01
    %1922 = vrot.lane.b32.xlu0 %v1920, 127
    %v1923 = vpop.permute.xlu0 %1922
    %v1925 = vmul.f32 %v1920, %v1923
    %v1926 = vrsqrt.pop %v1925
    %v1927 = vmul.f32 %v1925, %v1926
    %vm1928 = vcmp.eq.f32.partialorder %v1925, inf
    %v1929 = vsel %vm1928, %v1925, %v1927
    %vm1930 = vcmp.eq.f32.partialorder %v1925, 0.0
    %v1931 = vand.u32 %v1925, 2147483648
    %v1932 = vsel %vm1930, %v1931, %v1929
    %v1933 = vtanh.pop %v1914
    %1935 = vrot.lane.b32.xlu0 %v1933, 126
    %v1936 = vpop.permute.xlu0 %1935
    %v1938 = vmul.f32 %v1932, %v1936
    %1940 = vrot.lane.b32.xlu0 %v1938, 2
    %v1941 = vpop.permute.xlu0 %1940
    %v1943 = vsel %vm55, %v1917, %v1920
    %v1944 = vsel %vm1290, %v1943, %v1941
    %v1945 = vadd.f32 %v1618, %v1944
    %s1946 = scalar_lea.vmem %s2, 16
    %v1947 = vld [vmem:[%s1946] sm:$0xff]
    %v1948 = vsub.f32 %v1947, %v1945
    %v1949 = vmul.f32 %v1945, 0.16
    %1951 = vrot.lane.b32.xlu0 %v1949, 127
    %v1952 = vpop.permute.xlu0 %1951
    %v1954 = vmul.f32 %v1949, %v1952
    %v1955 = vmul.f32 %v1949, %v1949
    %1957 = vrot.lane.b32.xlu0 %v1955, 126
    %v1958 = vpop.permute.xlu0 %1957
    %v1960 = vsub.f32 %v1954, %v1958
    %v1961 = vrcp.pop %v1960
    %v1962 = vmul.f32 %v1948, %v1948
    %1963 = vrot.lane.b32.xlu0 %v1949, 125
    %v1964 = vpop.permute.xlu0 %1963
    %v1966 = vmul.f32 %v1962, %v1964
    %v1967 = vmul.f32 %v1962, %v1952
    %1969 = vrot.lane.b32.xlu0 %v1967, 127
    %v1970 = vpop.permute.xlu0 %1969
    %v1972 = vadd.f32 %v1966, %v1970
    %v1973 = vmul.f32 %v1949, 2.0
    %1975 = vrot.lane.b32.xlu0 %v1948, 4
    %v1976 = vpop.permute.xlu0 %1975
    %v1978 = vmul.f32 %v1973, %v1976
    %1979 = vrot.lane.b32.xlu0 %v1948, 3
    %v1980 = vpop.permute.xlu0 %1979
    %v1982 = vmul.f32 %v1978, %v1980
    %1984 = vrot.lane.b32.xlu0 %v1982, 124
    %v1985 = vpop.permute.xlu0 %1984
    %v1987 = vsub.f32 %v1972, %v1985
    %1989 = vrot.lane.b32.xlu0 %v1961, 126
    %v1990 = vpop.permute.xlu0 %1989
    %v1992 = vmul.f32 %v1987, %v1990
    %v1993 = vlog2.pop %v1960
    %v1994 = vmul.f32 %v1993, 0.6931472
    %1996 = vrot.lane.b32.xlu0 %v1994, 126
    %v1997 = vpop.permute.xlu0 %1996
    %v1999 = vadd.f32 %v1992, %v1997
    %v2000 = vmul.f32 %v1999, 0.5
    %v2001 = vadd.f32 %v1674, %v2000
    %v2002 = vlaneseq
    %v2003 = vshrl.u32 %v2002, 7
    %vm2004 = vcmp.lt.s32.totalorder %v2003, 2
    %v2005 = vsel %vm2004, %v2001, 0.0
    %vm2006 = vcmask 7168
    %v2007 = vsel %vm2006, %v2005, 0.0
    %v2008 = vrot.slane %v2007, 4
    %v2009 = vadd.f32 %v2007, %v2008
    %v2010 = vrot.slane %v2009, 2
    %v2011 = vadd.f32 %v2009, %v2010
    %v2012 = vrot.slane %v2011, 1
    %v2013 = vadd.f32 %v2011, %v2012
    %vm2014 = vcmask 0
    %2015 = vst.msk [vmem:[#allocation2] sm:$0x1] %vm2014, %v2013
    // Predicated region
    $region46: #{forward.1} parent=1 // pred_check
      _
    $region47: #{forward.1} parent=1 // pred_check_branch
      %2017 = sbr.rel (0) target = $region49
    $region48: #{forward.1} parent=1 // pred_region
      %s2019 = ssub.s32 16, 16
      %2020 = vsyncadd [#allocation3], %s2019
      %s2022 = sshll.u32 [#allocation2], 4
      %s2023 = int_to_ptr.vmem [resolvable:$true] %s2022
      %2025 = dma.vmem_to_hbm [thread:$0]  %s2023, 16, %s11, [#allocation3]
    $region49: #{forward.1} parent=1 // pred_fallthru
      _
    // Predicated region
    $region50: #{forward.1} parent=1 // pred_check
      _
    $region51: #{forward.1} parent=1 // pred_check_branch
      %2027 = sbr.rel (0) target = $region53
    $region52: #{forward.1} parent=1 // pred_region
      %2028 = dma.done [#allocation3], 16
    $region53: #{forward.1} parent=1 // pred_fallthru
      _
    %2029 = vsyncpa [#allocation3], 1

</llo_original>
